<compile_context>
chip_gen: v5e
topology: v5e:2x2
jax: 0.10.0
libtpu: 0.0.40
codegen_flags: <defaults>
</compile_context>

<pallas_src>
import functools

import jax
import jax.numpy as jnp
import numpy as np
from jax.experimental import pallas as pl
from jax.experimental.pallas import tpu as pltpu

MXU_DTYPE = jnp.bfloat16   # MXU feed dtype (f32 accumulation, f32 epilogue)


# ----------------------------------------------------------------------------
# Fused Pallas kernel: conv0(1x1) + conv1..conv4(3x3), BN folded, ReLU, adds.
# ----------------------------------------------------------------------------
def _encoder_block_kernel(x_ref, mask_ref, w_ref, b_ref, out_ref, pad_ref,
                          *, cin, cout, wp, m, pad_left, w_offsets):
    # x_ref:    (1, Cin, M)   pooled input, M = B_TILE*hp*wp (packed batch)
    # mask_ref: (9, M)        per-tap validity masks (0/1, f32)
    # w_ref:    (Cout, Ktot)  packed scale-folded conv weights (bf16, tap-major)
    # b_ref:    (Cout, 5)     folded BN biases (f32), one column per conv
    # out_ref:  (1, Cout, M)
    # pad_ref:  (Cmax, pad_left + M + wp + 1)  zero-halo scratch
    base = pad_left

    # Zero ONLY the halo columns, ONLY once: scratch persists across grid
    # steps, the interior is fully rewritten per conv, and only rows 0:C_l
    # are ever read.
    @pl.when(pl.program_id(0) == 0)
    def _init_halo():
        cmax = pad_ref.shape[0]
        halo_r = pad_ref.shape[1] - (base + m)
        pad_ref[:, 0:base] = jnp.zeros((cmax, base), jnp.float32)
        pad_ref[:, base + m:base + m + halo_r] = jnp.zeros((cmax, halo_r),
                                                           jnp.float32)

    masks = mask_ref[...]                                     # (9, M) f32
    x = x_ref[0]                                              # (Cin, M) f32

    # conv0: 1x1 projection (single matmul).
    w0 = w_ref[:, w_offsets[0]:w_offsets[0] + cin]            # (Cout, Cin) bf16
    proj = jnp.maximum(
        jnp.dot(w0, x.astype(MXU_DTYPE),
                preferred_element_type=jnp.float32) + b_ref[:, 0:1], 0.0)

    def conv3x3(f, layer):
        # f: (C_l, M) f32 -> ReLU(conv3x3(f) + b): (Cout, M) f32.
        # Direct per-tap accumulation: 9 small matmuls into an f32 value
        # accumulator -- no im2col slab, no slab store/reload traffic.
        c_l = f.shape[0]
        off = w_offsets[layer]
        pad_ref[0:c_l, base:base + m] = f                     # aligned store
        acc = jnp.zeros((cout, m), jnp.float32)
        for ky in range(3):
            for kx in range(3):
                t = ky * 3 + kx
                d = (ky - 1) * wp + (kx - 1)                  # flat spatial shift
                g = pad_ref[0:c_l, base + d:base + d + m]     # shifted window
                if t != 4:                                    # center tap mask==1
                    g = g * masks[t:t + 1, :]
                w_tap = w_ref[:, off + t * c_l:off + (t + 1) * c_l]
                acc = acc + jnp.dot(w_tap, g.astype(MXU_DTYPE),
                                    preferred_element_type=jnp.float32)
        return jnp.maximum(acc + b_ref[:, layer:layer + 1], 0.0)

    x1 = conv3x3(x, 1)                                        # conv1
    x2 = proj + conv3x3(x1, 2)                                # proj + conv2
    x3 = conv3x3(x2, 3)                                       # conv3
    out = x2 + conv3x3(x3, 4)                                 # x2 + conv4

    out_ref[0] = out.astype(out_ref.dtype)


# ----------------------------------------------------------------------------
# Host-side helpers
# ----------------------------------------------------------------------------
def _make_tap_masks(hp, wp):
    """mask[t, p] = 1 iff tap t=(ky,kx) of flat position p stays in-image."""
    y = np.arange(hp)[:, None]
    x = np.arange(wp)[None, :]
    rows = []
    for ky in range(3):
        for kx in range(3):
            dy, dx = ky - 1, kx - 1
            valid = ((y + dy >= 0) & (y + dy < hp) &
                     (x + dx >= 0) & (x + dx < wp))
            rows.append(valid.reshape(-1))
    return jnp.asarray(np.stack(rows).astype(np.float32))     # (9, hp*wp)


def _prep_params(params):
    """Pack the 5 scale-folded conv weights into one (Cout, Ktot) bf16 matrix
    (tap-major within each layer) and the 5 biases into one (Cout, 5) f32."""
    w_blocks, b_cols, offsets = [], [], []
    off = 0
    for name in ("conv0", "conv1", "conv2", "conv3", "conv4"):
        w = params[name]["w_hwio"]
        kh, kw, cin_k, cout = w.shape
        w2d = jnp.transpose(w, (3, 0, 1, 2)).reshape(cout, kh * kw * cin_k)
        w_blocks.append(w2d)
        b_cols.append(params[name]["bias"].reshape(cout, 1))
        offsets.append(off)
        off += kh * kw * cin_k
    return (jnp.concatenate(w_blocks, axis=1).astype(MXU_DTYPE),
            jnp.concatenate(b_cols, axis=1).astype(jnp.float32),
            tuple(offsets))


def _pick_batch_tile(n, cin, cout, m1, wp, vmem_budget=24 << 20):
    """Largest divisor of n whose packed block still fits the VMEM budget."""
    cmax = max(cin, cout)
    best = 1
    for bt in range(1, n + 1):
        if n % bt:
            continue
        m = bt * m1
        # double-buffered in/out blocks + resident masks + pad buffer
        # + ~6 live f32 (Cout, M) intermediates/accumulators.
        est = 4 * ((2 * cin + 2 * cout + 2 * 9 + cmax + 6 * cout) * m
                   + cmax * (256 + wp + 1))
        if est <= vmem_budget:
            best = bt
    return best


def make_conv_bn_params(key, cin, cout, ksize, eps=1e-5):
    kw_, kb, kg, kbeta = jax.random.split(key, 4)
    w = jax.random.normal(kw_, (ksize, ksize, cin, cout), jnp.float32) * 0.1
    conv_b = jax.random.normal(kb, (cout,), jnp.float32) * 0.05
    gamma = 1.0 + 0.1 * jax.random.normal(kg, (cout,), jnp.float32)
    beta = 0.1 * jax.random.normal(kbeta, (cout,), jnp.float32)
    run_mean = jnp.zeros((cout,), jnp.float32)     # BatchNorm2d init stats
    run_var = jnp.ones((cout,), jnp.float32)
    scale = gamma / jnp.sqrt(run_var + eps)
    # Fold inference-mode BN into the conv: BN(conv(x)+b) = (scale*w)*x + bias.
    return {"w_hwio": w * scale[None, None, None, :],
            "bias": scale * (conv_b - run_mean) + beta}


# ----------------------------------------------------------------------------
# EncoderBlock forward (NCHW in, NCHW out)
# ----------------------------------------------------------------------------
def encoder_block_forward(x_nchw, params):
    n, cin, h, w = x_nchw.shape
    assert h % 2 == 0 and w % 2 == 0
    hp, wp = h // 2, w // 2
    m1 = hp * wp
    cout = params["conv0"]["w_hwio"].shape[-1]
    cmax = max(cin, cout)

    # 2x2/2 max-pool + flatten spatial (cheap XLA ops).
    pooled = x_nchw.reshape(n, cin, hp, 2, wp, 2).max(axis=(3, 5))
    x_flat = pooled.reshape(n, cin, m1)

    # Pack B_TILE batch samples along the lane (flat spatial) axis.
    bt = _pick_batch_tile(n, cin, cout, m1, wp)
    groups = n // bt
    m = bt * m1
    x_packed = (x_flat.reshape(groups, bt, cin, m1)
                .transpose(0, 2, 1, 3).reshape(groups, cin, m))

    masks = jnp.tile(_make_tap_masks(hp, wp), (1, bt))        # (9, m)
    w_packed, b_packed, w_offsets = _prep_params(params)

    pad_left = ((wp + 1 + 127) // 128) * 128                  # lane-aligned halo
    pad_w = pad_left + m + wp + 1

    def _full(a):   # small operand, whole-array resident every grid step
        nd = a.ndim
        return pl.BlockSpec(a.shape, lambda i: (0,) * nd)

    out_packed = pl.pallas_call(
        functools.partial(_encoder_block_kernel, cin=cin, cout=cout, wp=wp,
                          m=m, pad_left=pad_left, w_offsets=w_offsets),
        grid=(groups,),
        in_specs=[pl.BlockSpec((1, cin, m), lambda i: (i, 0, 0)),
                  _full(masks), _full(w_packed), _full(b_packed)],
        out_specs=pl.BlockSpec((1, cout, m), lambda i: (i, 0, 0)),
        out_shape=jax.ShapeDtypeStruct((groups, cout, m), x_nchw.dtype),
        scratch_shapes=[pltpu.VMEM((cmax, pad_w), jnp.float32)],
        compiler_params=pltpu.CompilerParams(
            dimension_semantics=("parallel",),
            vmem_limit_bytes=32 * 1024 * 1024),
    )(x_packed, masks, w_packed, b_packed)

    # Unpack the batch samples and restore NCHW.
    return (out_packed.reshape(groups, cout, bt, m1)
            .transpose(0, 2, 1, 3).reshape(n, cout, hp, wp))


# ----------------------------------------------------------------------------
# Pure-JAX (XLA conv) reference for numerical sanity checking
# ----------------------------------------------------------------------------
def _ref_conv(x, p, residual=None):
    y = jax.lax.conv_general_dilated(
        x.astype(MXU_DTYPE), p["w_hwio"].astype(MXU_DTYPE),
        window_strides=(1, 1), padding="SAME",
        dimension_numbers=("NCHW", "HWIO", "NCHW"),
        preferred_element_type=jnp.float32)
    y = jnp.maximum(y + p["bias"][None, :, None, None], 0.0)
    return y if residual is None else y + residual


def _ref_forward(x_nchw, params):
    n, c, h, w = x_nchw.shape
    x = x_nchw.reshape(n, c, h // 2, 2, w // 2, 2).max(axis=(3, 5))
    proj = _ref_conv(x, params["conv0"])
    x1 = _ref_conv(x, params["conv1"])
    x2 = _ref_conv(x1, params["conv2"], residual=proj)
    x3 = _ref_conv(x2, params["conv3"])
    return _ref_conv(x3, params["conv4"], residual=x2)


# ----------------------------------------------------------------------------
if __name__ == "__main__":
    in_channels, out_channels = 4, 8
    N, H, W = 2, 16, 16

    root = jax.random.PRNGKey(0)
    kx, k0, k1, k2, k3, k4 = jax.random.split(root, 6)
    x = jax.random.normal(kx, (N, in_channels, H, W), jnp.float32)   # NCHW

    params = {
        "conv0": make_conv_bn_params(k0, in_channels, out_channels, 1),
        "conv1": make_conv_bn_params(k1, in_channels, out_channels, 3),
        "conv2": make_conv_bn_params(k2, out_channels, out_channels, 3),
        "conv3": make_conv_bn_params(k3, out_channels, out_channels, 3),
        "conv4": make_conv_bn_params(k4, out_channels, out_channels, 3),
    }

    out = jax.block_until_ready(jax.jit(encoder_block_forward)(x, params))
    ref = jax.block_until_ready(_ref_forward(x, params))

    assert out.shape == (N, out_channels, H // 2, W // 2), out.shape
    max_err = float(jnp.max(jnp.abs(out - ref)))
    assert jnp.allclose(out, ref, rtol=2e-2, atol=2e-2), max_err
    print("KERNEL_OK")
</pallas_src>

<mosaic_0001>
module attributes {stable_mosaic.version = 11 : i64} {
  func.func @_encoder_block_kernel(%arg0: i32, %arg1: memref<1x4x128xf32, #tpu.memory_space<vmem>>, %arg2: memref<9x128xf32, #tpu.memory_space<vmem>>, %arg3: memref<8x256xbf16, #tpu.memory_space<vmem>>, %arg4: memref<8x5xf32, #tpu.memory_space<vmem>>, %arg5: memref<1x8x128xf32, #tpu.memory_space<vmem>>, %arg6: memref<8x265xf32, #tpu.memory_space<vmem>>) attributes {dimension_semantics = [#tpu.dimension_semantics<parallel>], iteration_bounds = array<i64: 1>, scalar_prefetch = 0 : i64, scratch_operands = 1 : i64, tpu.core_type = #tpu.core_type<tc>, window_params = [{transform_indices = @transform_0, window_bounds = array<i64: 1, 4, 128>}, {pipeline_mode = #tpu.pipeline_mode<synchronous>, transform_indices = @transform_1, window_bounds = array<i64: 9, 128>}, {pipeline_mode = #tpu.pipeline_mode<synchronous>, transform_indices = @transform_2, window_bounds = array<i64: 8, 256>}, {pipeline_mode = #tpu.pipeline_mode<synchronous>, transform_indices = @transform_3, window_bounds = array<i64: 8, 5>}, {transform_indices = @transform_4, window_bounds = array<i64: 1, 8, 128>}]} {
    %c0_i32 = arith.constant 0 : i32
    %0 = arith.cmpi eq, %arg0, %c0_i32 : i32
    %1 = arith.extui %0 : i1 to i32
    %c0_i32_0 = arith.constant 0 : i32
    %2 = arith.cmpi ne, %1, %c0_i32_0 : i32
    scf.if %2 {
      %cst_172 = arith.constant 0.000000e+00 : f32
      %323 = vector.broadcast %cst_172 : f32 to vector<8x128xf32>
      %c0_173 = arith.constant 0 : index
      %c0_174 = arith.constant 0 : index
      %324 = vector.load %arg6[%c0_173, %c0_174] : memref<8x265xf32, #tpu.memory_space<vmem>>, vector<8x128xf32>
      tpu.vector_store %arg6[%c0_173, %c0_174], %323 {strides = array<i32>} : memref<8x265xf32, #tpu.memory_space<vmem>>, vector<8x128xf32>,
      %cst_175 = arith.constant 0.000000e+00 : f32
      %325 = vector.broadcast %cst_175 : f32 to vector<8x9xf32>
      %c0_176 = arith.constant 0 : index
      %c256 = arith.constant 256 : index
      %326 = vector.load %arg6[%c0_176, %c256] : memref<8x265xf32, #tpu.memory_space<vmem>>, vector<8x9xf32>
      tpu.vector_store %arg6[%c0_176, %c256], %325 {strides = array<i32>} : memref<8x265xf32, #tpu.memory_space<vmem>>, vector<8x9xf32>,
    } else {
    }
    %c0 = arith.constant 0 : index
    %c0_1 = arith.constant 0 : index
    %3 = vector.load %arg2[%c0, %c0_1] : memref<9x128xf32, #tpu.memory_space<vmem>>, vector<9x128xf32>
    %c0_2 = arith.constant 0 : index
    %c0_3 = arith.constant 0 : index
    %c0_4 = arith.constant 0 : index
    %4 = vector.load %arg1[%c0_2, %c0_3, %c0_4] : memref<1x4x128xf32, #tpu.memory_space<vmem>>, vector<1x4x128xf32>
    %5 = vector.shape_cast %4 : vector<1x4x128xf32> to vector<4x128xf32>
    %c0_5 = arith.constant 0 : index
    %c0_6 = arith.constant 0 : index
    %6 = vector.load %arg3[%c0_5, %c0_6] : memref<8x256xbf16, #tpu.memory_space<vmem>>, vector<8x4xbf16>
    %7 = arith.truncf %5 : vector<4x128xf32> to vector<4x128xbf16>
    %cst = arith.constant dense<0.000000e+00> : vector<8x128xf32>
    %8 = tpu.matmul %6, %7, %cst {dimension_numbers = #tpu.dot_dimension_numbers<[1], [0], [0], [1], [0, 0, 1, 1], [], []>} : vector<8x4xbf16>, vector<4x128xbf16>, vector<8x128xf32> -> vector<8x128xf32>
    %c0_7 = arith.constant 0 : index
    %c0_8 = arith.constant 0 : index
    %9 = vector.load %arg4[%c0_7, %c0_8] : memref<8x5xf32, #tpu.memory_space<vmem>>, vector<8x1xf32>
    %10 = vector.broadcast %9 : vector<8x1xf32> to vector<8x128xf32>
    %11 = arith.addf %8, %10 : vector<8x128xf32>
    %cst_9 = arith.constant 0.000000e+00 : f32
    %12 = vector.broadcast %cst_9 : f32 to vector<8x128xf32>
    %13 = arith.maximumf %11, %12 : vector<8x128xf32>
    %c0_10 = arith.constant 0 : index
    %c128 = arith.constant 128 : index
    %14 = vector.load %arg6[%c0_10, %c128] : memref<8x265xf32, #tpu.memory_space<vmem>>, vector<4x128xf32>
    tpu.vector_store %arg6[%c0_10, %c128], %5 {strides = array<i32>} : memref<8x265xf32, #tpu.memory_space<vmem>>, vector<4x128xf32>,
    %cst_11 = arith.constant 0.000000e+00 : f32
    %15 = vector.broadcast %cst_11 : f32 to vector<8x128xf32>
    %c0_12 = arith.constant 0 : index
    %c119 = arith.constant 119 : index
    %16 = vector.load %arg6[%c0_12, %c119] : memref<8x265xf32, #tpu.memory_space<vmem>>, vector<4x128xf32>
    %17 = vector.extract_strided_slice %3 {offsets = [0, 0], sizes = [1, 128], strides = [1, 1]} : vector<9x128xf32> to vector<1x128xf32>
    %18 = vector.broadcast %17 : vector<1x128xf32> to vector<4x128xf32>
    %19 = arith.mulf %16, %18 : vector<4x128xf32>
    %c0_13 = arith.constant 0 : index
    %c4 = arith.constant 4 : index
    %20 = vector.load %arg3[%c0_13, %c4] : memref<8x256xbf16, #tpu.memory_space<vmem>>, vector<8x4xbf16>
    %21 = arith.truncf %19 : vector<4x128xf32> to vector<4x128xbf16>
    %cst_14 = arith.constant dense<0.000000e+00> : vector<8x128xf32>
    %22 = tpu.matmul %20, %21, %cst_14 {dimension_numbers = #tpu.dot_dimension_numbers<[1], [0], [0], [1], [0, 0, 1, 1], [], []>} : vector<8x4xbf16>, vector<4x128xbf16>, vector<8x128xf32> -> vector<8x128xf32>
    %23 = arith.addf %15, %22 : vector<8x128xf32>
    %c0_15 = arith.constant 0 : index
    %c120 = arith.constant 120 : index
    %24 = vector.load %arg6[%c0_15, %c120] : memref<8x265xf32, #tpu.memory_space<vmem>>, vector<4x128xf32>
    %25 = vector.extract_strided_slice %3 {offsets = [1, 0], sizes = [1, 128], strides = [1, 1]} : vector<9x128xf32> to vector<1x128xf32>
    %26 = vector.broadcast %25 : vector<1x128xf32> to vector<4x128xf32>
    %27 = arith.mulf %24, %26 : vector<4x128xf32>
    %c0_16 = arith.constant 0 : index
    %c8 = arith.constant 8 : index
    %28 = vector.load %arg3[%c0_16, %c8] : memref<8x256xbf16, #tpu.memory_space<vmem>>, vector<8x4xbf16>
    %29 = arith.truncf %27 : vector<4x128xf32> to vector<4x128xbf16>
    %cst_17 = arith.constant dense<0.000000e+00> : vector<8x128xf32>
    %30 = tpu.matmul %28, %29, %cst_17 {dimension_numbers = #tpu.dot_dimension_numbers<[1], [0], [0], [1], [0, 0, 1, 1], [], []>} : vector<8x4xbf16>, vector<4x128xbf16>, vector<8x128xf32> -> vector<8x128xf32>
    %31 = arith.addf %23, %30 : vector<8x128xf32>
    %c0_18 = arith.constant 0 : index
    %c121 = arith.constant 121 : index
    %32 = vector.load %arg6[%c0_18, %c121] : memref<8x265xf32, #tpu.memory_space<vmem>>, vector<4x128xf32>
    %33 = vector.extract_strided_slice %3 {offsets = [2, 0], sizes = [1, 128], strides = [1, 1]} : vector<9x128xf32> to vector<1x128xf32>
    %34 = vector.broadcast %33 : vector<1x128xf32> to vector<4x128xf32>
    %35 = arith.mulf %32, %34 : vector<4x128xf32>
    %c0_19 = arith.constant 0 : index
    %c12 = arith.constant 12 : index
    %36 = vector.load %arg3[%c0_19, %c12] : memref<8x256xbf16, #tpu.memory_space<vmem>>, vector<8x4xbf16>
    %37 = arith.truncf %35 : vector<4x128xf32> to vector<4x128xbf16>
    %cst_20 = arith.constant dense<0.000000e+00> : vector<8x128xf32>
    %38 = tpu.matmul %36, %37, %cst_20 {dimension_numbers = #tpu.dot_dimension_numbers<[1], [0], [0], [1], [0, 0, 1, 1], [], []>} : vector<8x4xbf16>, vector<4x128xbf16>, vector<8x128xf32> -> vector<8x128xf32>
    %39 = arith.addf %31, %38 : vector<8x128xf32>
    %c0_21 = arith.constant 0 : index
    %c127 = arith.constant 127 : index
    %40 = vector.load %arg6[%c0_21, %c127] : memref<8x265xf32, #tpu.memory_space<vmem>>, vector<4x128xf32>
    %41 = vector.extract_strided_slice %3 {offsets = [3, 0], sizes = [1, 128], strides = [1, 1]} : vector<9x128xf32> to vector<1x128xf32>
    %42 = vector.broadcast %41 : vector<1x128xf32> to vector<4x128xf32>
    %43 = arith.mulf %40, %42 : vector<4x128xf32>
    %c0_22 = arith.constant 0 : index
    %c16 = arith.constant 16 : index
    %44 = vector.load %arg3[%c0_22, %c16] : memref<8x256xbf16, #tpu.memory_space<vmem>>, vector<8x4xbf16>
    %45 = arith.truncf %43 : vector<4x128xf32> to vector<4x128xbf16>
    %cst_23 = arith.constant dense<0.000000e+00> : vector<8x128xf32>
    %46 = tpu.matmul %44, %45, %cst_23 {dimension_numbers = #tpu.dot_dimension_numbers<[1], [0], [0], [1], [0, 0, 1, 1], [], []>} : vector<8x4xbf16>, vector<4x128xbf16>, vector<8x128xf32> -> vector<8x128xf32>
    %47 = arith.addf %39, %46 : vector<8x128xf32>
    %c0_24 = arith.constant 0 : index
    %c128_25 = arith.constant 128 : index
    %48 = vector.load %arg6[%c0_24, %c128_25] : memref<8x265xf32, #tpu.memory_space<vmem>>, vector<4x128xf32>
    %c0_26 = arith.constant 0 : index
    %c20 = arith.constant 20 : index
    %49 = vector.load %arg3[%c0_26, %c20] : memref<8x256xbf16, #tpu.memory_space<vmem>>, vector<8x4xbf16>
    %50 = arith.truncf %48 : vector<4x128xf32> to vector<4x128xbf16>
    %cst_27 = arith.constant dense<0.000000e+00> : vector<8x128xf32>
    %51 = tpu.matmul %49, %50, %cst_27 {dimension_numbers = #tpu.dot_dimension_numbers<[1], [0], [0], [1], [0, 0, 1, 1], [], []>} : vector<8x4xbf16>, vector<4x128xbf16>, vector<8x128xf32> -> vector<8x128xf32>
    %52 = arith.addf %47, %51 : vector<8x128xf32>
    %c0_28 = arith.constant 0 : index
    %c129 = arith.constant 129 : index
    %53 = vector.load %arg6[%c0_28, %c129] : memref<8x265xf32, #tpu.memory_space<vmem>>, vector<4x128xf32>
    %54 = vector.extract_strided_slice %3 {offsets = [5, 0], sizes = [1, 128], strides = [1, 1]} : vector<9x128xf32> to vector<1x128xf32>
    %55 = vector.broadcast %54 : vector<1x128xf32> to vector<4x128xf32>
    %56 = arith.mulf %53, %55 : vector<4x128xf32>
    %c0_29 = arith.constant 0 : index
    %c24 = arith.constant 24 : index
    %57 = vector.load %arg3[%c0_29, %c24] : memref<8x256xbf16, #tpu.memory_space<vmem>>, vector<8x4xbf16>
    %58 = arith.truncf %56 : vector<4x128xf32> to vector<4x128xbf16>
    %cst_30 = arith.constant dense<0.000000e+00> : vector<8x128xf32>
    %59 = tpu.matmul %57, %58, %cst_30 {dimension_numbers = #tpu.dot_dimension_numbers<[1], [0], [0], [1], [0, 0, 1, 1], [], []>} : vector<8x4xbf16>, vector<4x128xbf16>, vector<8x128xf32> -> vector<8x128xf32>
    %60 = arith.addf %52, %59 : vector<8x128xf32>
    %c0_31 = arith.constant 0 : index
    %c135 = arith.constant 135 : index
    %61 = vector.load %arg6[%c0_31, %c135] : memref<8x265xf32, #tpu.memory_space<vmem>>, vector<4x128xf32>
    %62 = vector.extract_strided_slice %3 {offsets = [6, 0], sizes = [1, 128], strides = [1, 1]} : vector<9x128xf32> to vector<1x128xf32>
    %63 = vector.broadcast %62 : vector<1x128xf32> to vector<4x128xf32>
    %64 = arith.mulf %61, %63 : vector<4x128xf32>
    %c0_32 = arith.constant 0 : index
    %c28 = arith.constant 28 : index
    %65 = vector.load %arg3[%c0_32, %c28] : memref<8x256xbf16, #tpu.memory_space<vmem>>, vector<8x4xbf16>
    %66 = arith.truncf %64 : vector<4x128xf32> to vector<4x128xbf16>
    %cst_33 = arith.constant dense<0.000000e+00> : vector<8x128xf32>
    %67 = tpu.matmul %65, %66, %cst_33 {dimension_numbers = #tpu.dot_dimension_numbers<[1], [0], [0], [1], [0, 0, 1, 1], [], []>} : vector<8x4xbf16>, vector<4x128xbf16>, vector<8x128xf32> -> vector<8x128xf32>
    %68 = arith.addf %60, %67 : vector<8x128xf32>
    %c0_34 = arith.constant 0 : index
    %c136 = arith.constant 136 : index
    %69 = vector.load %arg6[%c0_34, %c136] : memref<8x265xf32, #tpu.memory_space<vmem>>, vector<4x128xf32>
    %70 = vector.extract_strided_slice %3 {offsets = [7, 0], sizes = [1, 128], strides = [1, 1]} : vector<9x128xf32> to vector<1x128xf32>
    %71 = vector.broadcast %70 : vector<1x128xf32> to vector<4x128xf32>
    %72 = arith.mulf %69, %71 : vector<4x128xf32>
    %c0_35 = arith.constant 0 : index
    %c32 = arith.constant 32 : index
    %73 = vector.load %arg3[%c0_35, %c32] : memref<8x256xbf16, #tpu.memory_space<vmem>>, vector<8x4xbf16>
    %74 = arith.truncf %72 : vector<4x128xf32> to vector<4x128xbf16>
    %cst_36 = arith.constant dense<0.000000e+00> : vector<8x128xf32>
    %75 = tpu.matmul %73, %74, %cst_36 {dimension_numbers = #tpu.dot_dimension_numbers<[1], [0], [0], [1], [0, 0, 1, 1], [], []>} : vector<8x4xbf16>, vector<4x128xbf16>, vector<8x128xf32> -> vector<8x128xf32>
    %76 = arith.addf %68, %75 : vector<8x128xf32>
    %c0_37 = arith.constant 0 : index
    %c137 = arith.constant 137 : index
    %77 = vector.load %arg6[%c0_37, %c137] : memref<8x265xf32, #tpu.memory_space<vmem>>, vector<4x128xf32>
    %78 = vector.extract_strided_slice %3 {offsets = [8, 0], sizes = [1, 128], strides = [1, 1]} : vector<9x128xf32> to vector<1x128xf32>
    %79 = vector.broadcast %78 : vector<1x128xf32> to vector<4x128xf32>
    %80 = arith.mulf %77, %79 : vector<4x128xf32>
    %c0_38 = arith.constant 0 : index
    %c36 = arith.constant 36 : index
    %81 = vector.load %arg3[%c0_38, %c36] : memref<8x256xbf16, #tpu.memory_space<vmem>>, vector<8x4xbf16>
    %82 = arith.truncf %80 : vector<4x128xf32> to vector<4x128xbf16>
    %cst_39 = arith.constant dense<0.000000e+00> : vector<8x128xf32>
    %83 = tpu.matmul %81, %82, %cst_39 {dimension_numbers = #tpu.dot_dimension_numbers<[1], [0], [0], [1], [0, 0, 1, 1], [], []>} : vector<8x4xbf16>, vector<4x128xbf16>, vector<8x128xf32> -> vector<8x128xf32>
    %84 = arith.addf %76, %83 : vector<8x128xf32>
    %c0_40 = arith.constant 0 : index
    %c1 = arith.constant 1 : index
    %85 = vector.load %arg4[%c0_40, %c1] : memref<8x5xf32, #tpu.memory_space<vmem>>, vector<8x1xf32>
    %86 = vector.broadcast %85 : vector<8x1xf32> to vector<8x128xf32>
    %87 = arith.addf %84, %86 : vector<8x128xf32>
    %cst_41 = arith.constant 0.000000e+00 : f32
    %88 = vector.broadcast %cst_41 : f32 to vector<8x128xf32>
    %89 = arith.maximumf %87, %88 : vector<8x128xf32>
    %c0_42 = arith.constant 0 : index
    %c128_43 = arith.constant 128 : index
    %90 = vector.load %arg6[%c0_42, %c128_43] : memref<8x265xf32, #tpu.memory_space<vmem>>, vector<8x128xf32>
    tpu.vector_store %arg6[%c0_42, %c128_43], %89 {strides = array<i32>} : memref<8x265xf32, #tpu.memory_space<vmem>>, vector<8x128xf32>,
    %cst_44 = arith.constant 0.000000e+00 : f32
    %91 = vector.broadcast %cst_44 : f32 to vector<8x128xf32>
    %c0_45 = arith.constant 0 : index
    %c119_46 = arith.constant 119 : index
    %92 = vector.load %arg6[%c0_45, %c119_46] : memref<8x265xf32, #tpu.memory_space<vmem>>, vector<8x128xf32>
    %93 = vector.extract_strided_slice %3 {offsets = [0, 0], sizes = [1, 128], strides = [1, 1]} : vector<9x128xf32> to vector<1x128xf32>
    %94 = vector.broadcast %93 : vector<1x128xf32> to vector<8x128xf32>
    %95 = arith.mulf %92, %94 : vector<8x128xf32>
    %c0_47 = arith.constant 0 : index
    %c40 = arith.constant 40 : index
    %96 = vector.load %arg3[%c0_47, %c40] : memref<8x256xbf16, #tpu.memory_space<vmem>>, vector<8x8xbf16>
    %97 = arith.truncf %95 : vector<8x128xf32> to vector<8x128xbf16>
    %cst_48 = arith.constant dense<0.000000e+00> : vector<8x128xf32>
    %98 = tpu.matmul %96, %97, %cst_48 {dimension_numbers = #tpu.dot_dimension_numbers<[1], [0], [0], [1], [0, 0, 1, 1], [], []>} : vector<8x8xbf16>, vector<8x128xbf16>, vector<8x128xf32> -> vector<8x128xf32>
    %99 = arith.addf %91, %98 : vector<8x128xf32>
    %c0_49 = arith.constant 0 : index
    %c120_50 = arith.constant 120 : index
    %100 = vector.load %arg6[%c0_49, %c120_50] : memref<8x265xf32, #tpu.memory_space<vmem>>, vector<8x128xf32>
    %101 = vector.extract_strided_slice %3 {offsets = [1, 0], sizes = [1, 128], strides = [1, 1]} : vector<9x128xf32> to vector<1x128xf32>
    %102 = vector.broadcast %101 : vector<1x128xf32> to vector<8x128xf32>
    %103 = arith.mulf %100, %102 : vector<8x128xf32>
    %c0_51 = arith.constant 0 : index
    %c48 = arith.constant 48 : index
    %104 = vector.load %arg3[%c0_51, %c48] : memref<8x256xbf16, #tpu.memory_space<vmem>>, vector<8x8xbf16>
    %105 = arith.truncf %103 : vector<8x128xf32> to vector<8x128xbf16>
    %cst_52 = arith.constant dense<0.000000e+00> : vector<8x128xf32>
    %106 = tpu.matmul %104, %105, %cst_52 {dimension_numbers = #tpu.dot_dimension_numbers<[1], [0], [0], [1], [0, 0, 1, 1], [], []>} : vector<8x8xbf16>, vector<8x128xbf16>, vector<8x128xf32> -> vector<8x128xf32>
    %107 = arith.addf %99, %106 : vector<8x128xf32>
    %c0_53 = arith.constant 0 : index
    %c121_54 = arith.constant 121 : index
    %108 = vector.load %arg6[%c0_53, %c121_54] : memref<8x265xf32, #tpu.memory_space<vmem>>, vector<8x128xf32>
    %109 = vector.extract_strided_slice %3 {offsets = [2, 0], sizes = [1, 128], strides = [1, 1]} : vector<9x128xf32> to vector<1x128xf32>
    %110 = vector.broadcast %109 : vector<1x128xf32> to vector<8x128xf32>
    %111 = arith.mulf %108, %110 : vector<8x128xf32>
    %c0_55 = arith.constant 0 : index
    %c56 = arith.constant 56 : index
    %112 = vector.load %arg3[%c0_55, %c56] : memref<8x256xbf16, #tpu.memory_space<vmem>>, vector<8x8xbf16>
    %113 = arith.truncf %111 : vector<8x128xf32> to vector<8x128xbf16>
    %cst_56 = arith.constant dense<0.000000e+00> : vector<8x128xf32>
    %114 = tpu.matmul %112, %113, %cst_56 {dimension_numbers = #tpu.dot_dimension_numbers<[1], [0], [0], [1], [0, 0, 1, 1], [], []>} : vector<8x8xbf16>, vector<8x128xbf16>, vector<8x128xf32> -> vector<8x128xf32>
    %115 = arith.addf %107, %114 : vector<8x128xf32>
    %c0_57 = arith.constant 0 : index
    %c127_58 = arith.constant 127 : index
    %116 = vector.load %arg6[%c0_57, %c127_58] : memref<8x265xf32, #tpu.memory_space<vmem>>, vector<8x128xf32>
    %117 = vector.extract_strided_slice %3 {offsets = [3, 0], sizes = [1, 128], strides = [1, 1]} : vector<9x128xf32> to vector<1x128xf32>
    %118 = vector.broadcast %117 : vector<1x128xf32> to vector<8x128xf32>
    %119 = arith.mulf %116, %118 : vector<8x128xf32>
    %c0_59 = arith.constant 0 : index
    %c64 = arith.constant 64 : index
    %120 = vector.load %arg3[%c0_59, %c64] : memref<8x256xbf16, #tpu.memory_space<vmem>>, vector<8x8xbf16>
    %121 = arith.truncf %119 : vector<8x128xf32> to vector<8x128xbf16>
    %cst_60 = arith.constant dense<0.000000e+00> : vector<8x128xf32>
    %122 = tpu.matmul %120, %121, %cst_60 {dimension_numbers = #tpu.dot_dimension_numbers<[1], [0], [0], [1], [0, 0, 1, 1], [], []>} : vector<8x8xbf16>, vector<8x128xbf16>, vector<8x128xf32> -> vector<8x128xf32>
    %123 = arith.addf %115, %122 : vector<8x128xf32>
    %c0_61 = arith.constant 0 : index
    %c128_62 = arith.constant 128 : index
    %124 = vector.load %arg6[%c0_61, %c128_62] : memref<8x265xf32, #tpu.memory_space<vmem>>, vector<8x128xf32>
    %c0_63 = arith.constant 0 : index
    %c72 = arith.constant 72 : index
    %125 = vector.load %arg3[%c0_63, %c72] : memref<8x256xbf16, #tpu.memory_space<vmem>>, vector<8x8xbf16>
    %126 = arith.truncf %124 : vector<8x128xf32> to vector<8x128xbf16>
    %cst_64 = arith.constant dense<0.000000e+00> : vector<8x128xf32>
    %127 = tpu.matmul %125, %126, %cst_64 {dimension_numbers = #tpu.dot_dimension_numbers<[1], [0], [0], [1], [0, 0, 1, 1], [], []>} : vector<8x8xbf16>, vector<8x128xbf16>, vector<8x128xf32> -> vector<8x128xf32>
    %128 = arith.addf %123, %127 : vector<8x128xf32>
    %c0_65 = arith.constant 0 : index
    %c129_66 = arith.constant 129 : index
    %129 = vector.load %arg6[%c0_65, %c129_66] : memref<8x265xf32, #tpu.memory_space<vmem>>, vector<8x128xf32>
    %130 = vector.extract_strided_slice %3 {offsets = [5, 0], sizes = [1, 128], strides = [1, 1]} : vector<9x128xf32> to vector<1x128xf32>
    %131 = vector.broadcast %130 : vector<1x128xf32> to vector<8x128xf32>
    %132 = arith.mulf %129, %131 : vector<8x128xf32>
    %c0_67 = arith.constant 0 : index
    %c80 = arith.constant 80 : index
    %133 = vector.load %arg3[%c0_67, %c80] : memref<8x256xbf16, #tpu.memory_space<vmem>>, vector<8x8xbf16>
    %134 = arith.truncf %132 : vector<8x128xf32> to vector<8x128xbf16>
    %cst_68 = arith.constant dense<0.000000e+00> : vector<8x128xf32>
    %135 = tpu.matmul %133, %134, %cst_68 {dimension_numbers = #tpu.dot_dimension_numbers<[1], [0], [0], [1], [0, 0, 1, 1], [], []>} : vector<8x8xbf16>, vector<8x128xbf16>, vector<8x128xf32> -> vector<8x128xf32>
    %136 = arith.addf %128, %135 : vector<8x128xf32>
    %c0_69 = arith.constant 0 : index
    %c135_70 = arith.constant 135 : index
    %137 = vector.load %arg6[%c0_69, %c135_70] : memref<8x265xf32, #tpu.memory_space<vmem>>, vector<8x128xf32>
    %138 = vector.extract_strided_slice %3 {offsets = [6, 0], sizes = [1, 128], strides = [1, 1]} : vector<9x128xf32> to vector<1x128xf32>
    %139 = vector.broadcast %138 : vector<1x128xf32> to vector<8x128xf32>
    %140 = arith.mulf %137, %139 : vector<8x128xf32>
    %c0_71 = arith.constant 0 : index
    %c88 = arith.constant 88 : index
    %141 = vector.load %arg3[%c0_71, %c88] : memref<8x256xbf16, #tpu.memory_space<vmem>>, vector<8x8xbf16>
    %142 = arith.truncf %140 : vector<8x128xf32> to vector<8x128xbf16>
    %cst_72 = arith.constant dense<0.000000e+00> : vector<8x128xf32>
    %143 = tpu.matmul %141, %142, %cst_72 {dimension_numbers = #tpu.dot_dimension_numbers<[1], [0], [0], [1], [0, 0, 1, 1], [], []>} : vector<8x8xbf16>, vector<8x128xbf16>, vector<8x128xf32> -> vector<8x128xf32>
    %144 = arith.addf %136, %143 : vector<8x128xf32>
    %c0_73 = arith.constant 0 : index
    %c136_74 = arith.constant 136 : index
    %145 = vector.load %arg6[%c0_73, %c136_74] : memref<8x265xf32, #tpu.memory_space<vmem>>, vector<8x128xf32>
    %146 = vector.extract_strided_slice %3 {offsets = [7, 0], sizes = [1, 128], strides = [1, 1]} : vector<9x128xf32> to vector<1x128xf32>
    %147 = vector.broadcast %146 : vector<1x128xf32> to vector<8x128xf32>
    %148 = arith.mulf %145, %147 : vector<8x128xf32>
    %c0_75 = arith.constant 0 : index
    %c96 = arith.constant 96 : index
    %149 = vector.load %arg3[%c0_75, %c96] : memref<8x256xbf16, #tpu.memory_space<vmem>>, vector<8x8xbf16>
    %150 = arith.truncf %148 : vector<8x128xf32> to vector<8x128xbf16>
    %cst_76 = arith.constant dense<0.000000e+00> : vector<8x128xf32>
    %151 = tpu.matmul %149, %150, %cst_76 {dimension_numbers = #tpu.dot_dimension_numbers<[1], [0], [0], [1], [0, 0, 1, 1], [], []>} : vector<8x8xbf16>, vector<8x128xbf16>, vector<8x128xf32> -> vector<8x128xf32>
    %152 = arith.addf %144, %151 : vector<8x128xf32>
    %c0_77 = arith.constant 0 : index
    %c137_78 = arith.constant 137 : index
    %153 = vector.load %arg6[%c0_77, %c137_78] : memref<8x265xf32, #tpu.memory_space<vmem>>, vector<8x128xf32>
    %154 = vector.extract_strided_slice %3 {offsets = [8, 0], sizes = [1, 128], strides = [1, 1]} : vector<9x128xf32> to vector<1x128xf32>
    %155 = vector.broadcast %154 : vector<1x128xf32> to vector<8x128xf32>
    %156 = arith.mulf %153, %155 : vector<8x128xf32>
    %c0_79 = arith.constant 0 : index
    %c104 = arith.constant 104 : index
    %157 = vector.load %arg3[%c0_79, %c104] : memref<8x256xbf16, #tpu.memory_space<vmem>>, vector<8x8xbf16>
    %158 = arith.truncf %156 : vector<8x128xf32> to vector<8x128xbf16>
    %cst_80 = arith.constant dense<0.000000e+00> : vector<8x128xf32>
    %159 = tpu.matmul %157, %158, %cst_80 {dimension_numbers = #tpu.dot_dimension_numbers<[1], [0], [0], [1], [0, 0, 1, 1], [], []>} : vector<8x8xbf16>, vector<8x128xbf16>, vector<8x128xf32> -> vector<8x128xf32>
    %160 = arith.addf %152, %159 : vector<8x128xf32>
    %c0_81 = arith.constant 0 : index
    %c2 = arith.constant 2 : index
    %161 = vector.load %arg4[%c0_81, %c2] : memref<8x5xf32, #tpu.memory_space<vmem>>, vector<8x1xf32>
    %162 = vector.broadcast %161 : vector<8x1xf32> to vector<8x128xf32>
    %163 = arith.addf %160, %162 : vector<8x128xf32>
    %cst_82 = arith.constant 0.000000e+00 : f32
    %164 = vector.broadcast %cst_82 : f32 to vector<8x128xf32>
    %165 = arith.maximumf %163, %164 : vector<8x128xf32>
    %166 = arith.addf %13, %165 : vector<8x128xf32>
    %c0_83 = arith.constant 0 : index
    %c128_84 = arith.constant 128 : index
    %167 = vector.load %arg6[%c0_83, %c128_84] : memref<8x265xf32, #tpu.memory_space<vmem>>, vector<8x128xf32>
    tpu.vector_store %arg6[%c0_83, %c128_84], %166 {strides = array<i32>} : memref<8x265xf32, #tpu.memory_space<vmem>>, vector<8x128xf32>,
    %cst_85 = arith.constant 0.000000e+00 : f32
    %168 = vector.broadcast %cst_85 : f32 to vector<8x128xf32>
    %c0_86 = arith.constant 0 : index
    %c119_87 = arith.constant 119 : index
    %169 = vector.load %arg6[%c0_86, %c119_87] : memref<8x265xf32, #tpu.memory_space<vmem>>, vector<8x128xf32>
    %170 = vector.extract_strided_slice %3 {offsets = [0, 0], sizes = [1, 128], strides = [1, 1]} : vector<9x128xf32> to vector<1x128xf32>
    %171 = vector.broadcast %170 : vector<1x128xf32> to vector<8x128xf32>
    %172 = arith.mulf %169, %171 : vector<8x128xf32>
    %c0_88 = arith.constant 0 : index
    %c112 = arith.constant 112 : index
    %173 = vector.load %arg3[%c0_88, %c112] : memref<8x256xbf16, #tpu.memory_space<vmem>>, vector<8x8xbf16>
    %174 = arith.truncf %172 : vector<8x128xf32> to vector<8x128xbf16>
    %cst_89 = arith.constant dense<0.000000e+00> : vector<8x128xf32>
    %175 = tpu.matmul %173, %174, %cst_89 {dimension_numbers = #tpu.dot_dimension_numbers<[1], [0], [0], [1], [0, 0, 1, 1], [], []>} : vector<8x8xbf16>, vector<8x128xbf16>, vector<8x128xf32> -> vector<8x128xf32>
    %176 = arith.addf %168, %175 : vector<8x128xf32>
    %c0_90 = arith.constant 0 : index
    %c120_91 = arith.constant 120 : index
    %177 = vector.load %arg6[%c0_90, %c120_91] : memref<8x265xf32, #tpu.memory_space<vmem>>, vector<8x128xf32>
    %178 = vector.extract_strided_slice %3 {offsets = [1, 0], sizes = [1, 128], strides = [1, 1]} : vector<9x128xf32> to vector<1x128xf32>
    %179 = vector.broadcast %178 : vector<1x128xf32> to vector<8x128xf32>
    %180 = arith.mulf %177, %179 : vector<8x128xf32>
    %c0_92 = arith.constant 0 : index
    %c120_93 = arith.constant 120 : index
    %181 = vector.load %arg3[%c0_92, %c120_93] : memref<8x256xbf16, #tpu.memory_space<vmem>>, vector<8x8xbf16>
    %182 = arith.truncf %180 : vector<8x128xf32> to vector<8x128xbf16>
    %cst_94 = arith.constant dense<0.000000e+00> : vector<8x128xf32>
    %183 = tpu.matmul %181, %182, %cst_94 {dimension_numbers = #tpu.dot_dimension_numbers<[1], [0], [0], [1], [0, 0, 1, 1], [], []>} : vector<8x8xbf16>, vector<8x128xbf16>, vector<8x128xf32> -> vector<8x128xf32>
    %184 = arith.addf %176, %183 : vector<8x128xf32>
    %c0_95 = arith.constant 0 : index
    %c121_96 = arith.constant 121 : index
    %185 = vector.load %arg6[%c0_95, %c121_96] : memref<8x265xf32, #tpu.memory_space<vmem>>, vector<8x128xf32>
    %186 = vector.extract_strided_slice %3 {offsets = [2, 0], sizes = [1, 128], strides = [1, 1]} : vector<9x128xf32> to vector<1x128xf32>
    %187 = vector.broadcast %186 : vector<1x128xf32> to vector<8x128xf32>
    %188 = arith.mulf %185, %187 : vector<8x128xf32>
    %c0_97 = arith.constant 0 : index
    %c128_98 = arith.constant 128 : index
    %189 = vector.load %arg3[%c0_97, %c128_98] : memref<8x256xbf16, #tpu.memory_space<vmem>>, vector<8x8xbf16>
    %190 = arith.truncf %188 : vector<8x128xf32> to vector<8x128xbf16>
    %cst_99 = arith.constant dense<0.000000e+00> : vector<8x128xf32>
    %191 = tpu.matmul %189, %190, %cst_99 {dimension_numbers = #tpu.dot_dimension_numbers<[1], [0], [0], [1], [0, 0, 1, 1], [], []>} : vector<8x8xbf16>, vector<8x128xbf16>, vector<8x128xf32> -> vector<8x128xf32>
    %192 = arith.addf %184, %191 : vector<8x128xf32>
    %c0_100 = arith.constant 0 : index
    %c127_101 = arith.constant 127 : index
    %193 = vector.load %arg6[%c0_100, %c127_101] : memref<8x265xf32, #tpu.memory_space<vmem>>, vector<8x128xf32>
    %194 = vector.extract_strided_slice %3 {offsets = [3, 0], sizes = [1, 128], strides = [1, 1]} : vector<9x128xf32> to vector<1x128xf32>
    %195 = vector.broadcast %194 : vector<1x128xf32> to vector<8x128xf32>
    %196 = arith.mulf %193, %195 : vector<8x128xf32>
    %c0_102 = arith.constant 0 : index
    %c136_103 = arith.constant 136 : index
    %197 = vector.load %arg3[%c0_102, %c136_103] : memref<8x256xbf16, #tpu.memory_space<vmem>>, vector<8x8xbf16>
    %198 = arith.truncf %196 : vector<8x128xf32> to vector<8x128xbf16>
    %cst_104 = arith.constant dense<0.000000e+00> : vector<8x128xf32>
    %199 = tpu.matmul %197, %198, %cst_104 {dimension_numbers = #tpu.dot_dimension_numbers<[1], [0], [0], [1], [0, 0, 1, 1], [], []>} : vector<8x8xbf16>, vector<8x128xbf16>, vector<8x128xf32> -> vector<8x128xf32>
    %200 = arith.addf %192, %199 : vector<8x128xf32>
    %c0_105 = arith.constant 0 : index
    %c128_106 = arith.constant 128 : index
    %201 = vector.load %arg6[%c0_105, %c128_106] : memref<8x265xf32, #tpu.memory_space<vmem>>, vector<8x128xf32>
    %c0_107 = arith.constant 0 : index
    %c144 = arith.constant 144 : index
    %202 = vector.load %arg3[%c0_107, %c144] : memref<8x256xbf16, #tpu.memory_space<vmem>>, vector<8x8xbf16>
    %203 = arith.truncf %201 : vector<8x128xf32> to vector<8x128xbf16>
    %cst_108 = arith.constant dense<0.000000e+00> : vector<8x128xf32>
    %204 = tpu.matmul %202, %203, %cst_108 {dimension_numbers = #tpu.dot_dimension_numbers<[1], [0], [0], [1], [0, 0, 1, 1], [], []>} : vector<8x8xbf16>, vector<8x128xbf16>, vector<8x128xf32> -> vector<8x128xf32>
    %205 = arith.addf %200, %204 : vector<8x128xf32>
    %c0_109 = arith.constant 0 : index
    %c129_110 = arith.constant 129 : index
    %206 = vector.load %arg6[%c0_109, %c129_110] : memref<8x265xf32, #tpu.memory_space<vmem>>, vector<8x128xf32>
    %207 = vector.extract_strided_slice %3 {offsets = [5, 0], sizes = [1, 128], strides = [1, 1]} : vector<9x128xf32> to vector<1x128xf32>
    %208 = vector.broadcast %207 : vector<1x128xf32> to vector<8x128xf32>
    %209 = arith.mulf %206, %208 : vector<8x128xf32>
    %c0_111 = arith.constant 0 : index
    %c152 = arith.constant 152 : index
    %210 = vector.load %arg3[%c0_111, %c152] : memref<8x256xbf16, #tpu.memory_space<vmem>>, vector<8x8xbf16>
    %211 = arith.truncf %209 : vector<8x128xf32> to vector<8x128xbf16>
    %cst_112 = arith.constant dense<0.000000e+00> : vector<8x128xf32>
    %212 = tpu.matmul %210, %211, %cst_112 {dimension_numbers = #tpu.dot_dimension_numbers<[1], [0], [0], [1], [0, 0, 1, 1], [], []>} : vector<8x8xbf16>, vector<8x128xbf16>, vector<8x128xf32> -> vector<8x128xf32>
    %213 = arith.addf %205, %212 : vector<8x128xf32>
    %c0_113 = arith.constant 0 : index
    %c135_114 = arith.constant 135 : index
    %214 = vector.load %arg6[%c0_113, %c135_114] : memref<8x265xf32, #tpu.memory_space<vmem>>, vector<8x128xf32>
    %215 = vector.extract_strided_slice %3 {offsets = [6, 0], sizes = [1, 128], strides = [1, 1]} : vector<9x128xf32> to vector<1x128xf32>
    %216 = vector.broadcast %215 : vector<1x128xf32> to vector<8x128xf32>
    %217 = arith.mulf %214, %216 : vector<8x128xf32>
    %c0_115 = arith.constant 0 : index
    %c160 = arith.constant 160 : index
    %218 = vector.load %arg3[%c0_115, %c160] : memref<8x256xbf16, #tpu.memory_space<vmem>>, vector<8x8xbf16>
    %219 = arith.truncf %217 : vector<8x128xf32> to vector<8x128xbf16>
    %cst_116 = arith.constant dense<0.000000e+00> : vector<8x128xf32>
    %220 = tpu.matmul %218, %219, %cst_116 {dimension_numbers = #tpu.dot_dimension_numbers<[1], [0], [0], [1], [0, 0, 1, 1], [], []>} : vector<8x8xbf16>, vector<8x128xbf16>, vector<8x128xf32> -> vector<8x128xf32>
    %221 = arith.addf %213, %220 : vector<8x128xf32>
    %c0_117 = arith.constant 0 : index
    %c136_118 = arith.constant 136 : index
    %222 = vector.load %arg6[%c0_117, %c136_118] : memref<8x265xf32, #tpu.memory_space<vmem>>, vector<8x128xf32>
    %223 = vector.extract_strided_slice %3 {offsets = [7, 0], sizes = [1, 128], strides = [1, 1]} : vector<9x128xf32> to vector<1x128xf32>
    %224 = vector.broadcast %223 : vector<1x128xf32> to vector<8x128xf32>
    %225 = arith.mulf %222, %224 : vector<8x128xf32>
    %c0_119 = arith.constant 0 : index
    %c168 = arith.constant 168 : index
    %226 = vector.load %arg3[%c0_119, %c168] : memref<8x256xbf16, #tpu.memory_space<vmem>>, vector<8x8xbf16>
    %227 = arith.truncf %225 : vector<8x128xf32> to vector<8x128xbf16>
    %cst_120 = arith.constant dense<0.000000e+00> : vector<8x128xf32>
    %228 = tpu.matmul %226, %227, %cst_120 {dimension_numbers = #tpu.dot_dimension_numbers<[1], [0], [0], [1], [0, 0, 1, 1], [], []>} : vector<8x8xbf16>, vector<8x128xbf16>, vector<8x128xf32> -> vector<8x128xf32>
    %229 = arith.addf %221, %228 : vector<8x128xf32>
    %c0_121 = arith.constant 0 : index
    %c137_122 = arith.constant 137 : index
    %230 = vector.load %arg6[%c0_121, %c137_122] : memref<8x265xf32, #tpu.memory_space<vmem>>, vector<8x128xf32>
    %231 = vector.extract_strided_slice %3 {offsets = [8, 0], sizes = [1, 128], strides = [1, 1]} : vector<9x128xf32> to vector<1x128xf32>
    %232 = vector.broadcast %231 : vector<1x128xf32> to vector<8x128xf32>
    %233 = arith.mulf %230, %232 : vector<8x128xf32>
    %c0_123 = arith.constant 0 : index
    %c176 = arith.constant 176 : index
    %234 = vector.load %arg3[%c0_123, %c176] : memref<8x256xbf16, #tpu.memory_space<vmem>>, vector<8x8xbf16>
    %235 = arith.truncf %233 : vector<8x128xf32> to vector<8x128xbf16>
    %cst_124 = arith.constant dense<0.000000e+00> : vector<8x128xf32>
    %236 = tpu.matmul %234, %235, %cst_124 {dimension_numbers = #tpu.dot_dimension_numbers<[1], [0], [0], [1], [0, 0, 1, 1], [], []>} : vector<8x8xbf16>, vector<8x128xbf16>, vector<8x128xf32> -> vector<8x128xf32>
    %237 = arith.addf %229, %236 : vector<8x128xf32>
    %c0_125 = arith.constant 0 : index
    %c3 = arith.constant 3 : index
    %238 = vector.load %arg4[%c0_125, %c3] : memref<8x5xf32, #tpu.memory_space<vmem>>, vector<8x1xf32>
    %239 = vector.broadcast %238 : vector<8x1xf32> to vector<8x128xf32>
    %240 = arith.addf %237, %239 : vector<8x128xf32>
    %cst_126 = arith.constant 0.000000e+00 : f32
    %241 = vector.broadcast %cst_126 : f32 to vector<8x128xf32>
    %242 = arith.maximumf %240, %241 : vector<8x128xf32>
    %c0_127 = arith.constant 0 : index
    %c128_128 = arith.constant 128 : index
    %243 = vector.load %arg6[%c0_127, %c128_128] : memref<8x265xf32, #tpu.memory_space<vmem>>, vector<8x128xf32>
    tpu.vector_store %arg6[%c0_127, %c128_128], %242 {strides = array<i32>} : memref<8x265xf32, #tpu.memory_space<vmem>>, vector<8x128xf32>,
    %cst_129 = arith.constant 0.000000e+00 : f32
    %244 = vector.broadcast %cst_129 : f32 to vector<8x128xf32>
    %c0_130 = arith.constant 0 : index
    %c119_131 = arith.constant 119 : index
    %245 = vector.load %arg6[%c0_130, %c119_131] : memref<8x265xf32, #tpu.memory_space<vmem>>, vector<8x128xf32>
    %246 = vector.extract_strided_slice %3 {offsets = [0, 0], sizes = [1, 128], strides = [1, 1]} : vector<9x128xf32> to vector<1x128xf32>
    %247 = vector.broadcast %246 : vector<1x128xf32> to vector<8x128xf32>
    %248 = arith.mulf %245, %247 : vector<8x128xf32>
    %c0_132 = arith.constant 0 : index
    %c184 = arith.constant 184 : index
    %249 = vector.load %arg3[%c0_132, %c184] : memref<8x256xbf16, #tpu.memory_space<vmem>>, vector<8x8xbf16>
    %250 = arith.truncf %248 : vector<8x128xf32> to vector<8x128xbf16>
    %cst_133 = arith.constant dense<0.000000e+00> : vector<8x128xf32>
    %251 = tpu.matmul %249, %250, %cst_133 {dimension_numbers = #tpu.dot_dimension_numbers<[1], [0], [0], [1], [0, 0, 1, 1], [], []>} : vector<8x8xbf16>, vector<8x128xbf16>, vector<8x128xf32> -> vector<8x128xf32>
    %252 = arith.addf %244, %251 : vector<8x128xf32>
    %c0_134 = arith.constant 0 : index
    %c120_135 = arith.constant 120 : index
    %253 = vector.load %arg6[%c0_134, %c120_135] : memref<8x265xf32, #tpu.memory_space<vmem>>, vector<8x128xf32>
    %254 = vector.extract_strided_slice %3 {offsets = [1, 0], sizes = [1, 128], strides = [1, 1]} : vector<9x128xf32> to vector<1x128xf32>
    %255 = vector.broadcast %254 : vector<1x128xf32> to vector<8x128xf32>
    %256 = arith.mulf %253, %255 : vector<8x128xf32>
    %c0_136 = arith.constant 0 : index
    %c192 = arith.constant 192 : index
    %257 = vector.load %arg3[%c0_136, %c192] : memref<8x256xbf16, #tpu.memory_space<vmem>>, vector<8x8xbf16>
    %258 = arith.truncf %256 : vector<8x128xf32> to vector<8x128xbf16>
    %cst_137 = arith.constant dense<0.000000e+00> : vector<8x128xf32>
    %259 = tpu.matmul %257, %258, %cst_137 {dimension_numbers = #tpu.dot_dimension_numbers<[1], [0], [0], [1], [0, 0, 1, 1], [], []>} : vector<8x8xbf16>, vector<8x128xbf16>, vector<8x128xf32> -> vector<8x128xf32>
    %260 = arith.addf %252, %259 : vector<8x128xf32>
    %c0_138 = arith.constant 0 : index
    %c121_139 = arith.constant 121 : index
    %261 = vector.load %arg6[%c0_138, %c121_139] : memref<8x265xf32, #tpu.memory_space<vmem>>, vector<8x128xf32>
    %262 = vector.extract_strided_slice %3 {offsets = [2, 0], sizes = [1, 128], strides = [1, 1]} : vector<9x128xf32> to vector<1x128xf32>
    %263 = vector.broadcast %262 : vector<1x128xf32> to vector<8x128xf32>
    %264 = arith.mulf %261, %263 : vector<8x128xf32>
    %c0_140 = arith.constant 0 : index
    %c200 = arith.constant 200 : index
    %265 = vector.load %arg3[%c0_140, %c200] : memref<8x256xbf16, #tpu.memory_space<vmem>>, vector<8x8xbf16>
    %266 = arith.truncf %264 : vector<8x128xf32> to vector<8x128xbf16>
    %cst_141 = arith.constant dense<0.000000e+00> : vector<8x128xf32>
    %267 = tpu.matmul %265, %266, %cst_141 {dimension_numbers = #tpu.dot_dimension_numbers<[1], [0], [0], [1], [0, 0, 1, 1], [], []>} : vector<8x8xbf16>, vector<8x128xbf16>, vector<8x128xf32> -> vector<8x128xf32>
    %268 = arith.addf %260, %267 : vector<8x128xf32>
    %c0_142 = arith.constant 0 : index
    %c127_143 = arith.constant 127 : index
    %269 = vector.load %arg6[%c0_142, %c127_143] : memref<8x265xf32, #tpu.memory_space<vmem>>, vector<8x128xf32>
    %270 = vector.extract_strided_slice %3 {offsets = [3, 0], sizes = [1, 128], strides = [1, 1]} : vector<9x128xf32> to vector<1x128xf32>
    %271 = vector.broadcast %270 : vector<1x128xf32> to vector<8x128xf32>
    %272 = arith.mulf %269, %271 : vector<8x128xf32>
    %c0_144 = arith.constant 0 : index
    %c208 = arith.constant 208 : index
    %273 = vector.load %arg3[%c0_144, %c208] : memref<8x256xbf16, #tpu.memory_space<vmem>>, vector<8x8xbf16>
    %274 = arith.truncf %272 : vector<8x128xf32> to vector<8x128xbf16>
    %cst_145 = arith.constant dense<0.000000e+00> : vector<8x128xf32>
    %275 = tpu.matmul %273, %274, %cst_145 {dimension_numbers = #tpu.dot_dimension_numbers<[1], [0], [0], [1], [0, 0, 1, 1], [], []>} : vector<8x8xbf16>, vector<8x128xbf16>, vector<8x128xf32> -> vector<8x128xf32>
    %276 = arith.addf %268, %275 : vector<8x128xf32>
    %c0_146 = arith.constant 0 : index
    %c128_147 = arith.constant 128 : index
    %277 = vector.load %arg6[%c0_146, %c128_147] : memref<8x265xf32, #tpu.memory_space<vmem>>, vector<8x128xf32>
    %c0_148 = arith.constant 0 : index
    %c216 = arith.constant 216 : index
    %278 = vector.load %arg3[%c0_148, %c216] : memref<8x256xbf16, #tpu.memory_space<vmem>>, vector<8x8xbf16>
    %279 = arith.truncf %277 : vector<8x128xf32> to vector<8x128xbf16>
    %cst_149 = arith.constant dense<0.000000e+00> : vector<8x128xf32>
    %280 = tpu.matmul %278, %279, %cst_149 {dimension_numbers = #tpu.dot_dimension_numbers<[1], [0], [0], [1], [0, 0, 1, 1], [], []>} : vector<8x8xbf16>, vector<8x128xbf16>, vector<8x128xf32> -> vector<8x128xf32>
    %281 = arith.addf %276, %280 : vector<8x128xf32>
    %c0_150 = arith.constant 0 : index
    %c129_151 = arith.constant 129 : index
    %282 = vector.load %arg6[%c0_150, %c129_151] : memref<8x265xf32, #tpu.memory_space<vmem>>, vector<8x128xf32>
    %283 = vector.extract_strided_slice %3 {offsets = [5, 0], sizes = [1, 128], strides = [1, 1]} : vector<9x128xf32> to vector<1x128xf32>
    %284 = vector.broadcast %283 : vector<1x128xf32> to vector<8x128xf32>
    %285 = arith.mulf %282, %284 : vector<8x128xf32>
    %c0_152 = arith.constant 0 : index
    %c224 = arith.constant 224 : index
    %286 = vector.load %arg3[%c0_152, %c224] : memref<8x256xbf16, #tpu.memory_space<vmem>>, vector<8x8xbf16>
    %287 = arith.truncf %285 : vector<8x128xf32> to vector<8x128xbf16>
    %cst_153 = arith.constant dense<0.000000e+00> : vector<8x128xf32>
    %288 = tpu.matmul %286, %287, %cst_153 {dimension_numbers = #tpu.dot_dimension_numbers<[1], [0], [0], [1], [0, 0, 1, 1], [], []>} : vector<8x8xbf16>, vector<8x128xbf16>, vector<8x128xf32> -> vector<8x128xf32>
    %289 = arith.addf %281, %288 : vector<8x128xf32>
    %c0_154 = arith.constant 0 : index
    %c135_155 = arith.constant 135 : index
    %290 = vector.load %arg6[%c0_154, %c135_155] : memref<8x265xf32, #tpu.memory_space<vmem>>, vector<8x128xf32>
    %291 = vector.extract_strided_slice %3 {offsets = [6, 0], sizes = [1, 128], strides = [1, 1]} : vector<9x128xf32> to vector<1x128xf32>
    %292 = vector.broadcast %291 : vector<1x128xf32> to vector<8x128xf32>
    %293 = arith.mulf %290, %292 : vector<8x128xf32>
    %c0_156 = arith.constant 0 : index
    %c232 = arith.constant 232 : index
    %294 = vector.load %arg3[%c0_156, %c232] : memref<8x256xbf16, #tpu.memory_space<vmem>>, vector<8x8xbf16>
    %295 = arith.truncf %293 : vector<8x128xf32> to vector<8x128xbf16>
    %cst_157 = arith.constant dense<0.000000e+00> : vector<8x128xf32>
    %296 = tpu.matmul %294, %295, %cst_157 {dimension_numbers = #tpu.dot_dimension_numbers<[1], [0], [0], [1], [0, 0, 1, 1], [], []>} : vector<8x8xbf16>, vector<8x128xbf16>, vector<8x128xf32> -> vector<8x128xf32>
    %297 = arith.addf %289, %296 : vector<8x128xf32>
    %c0_158 = arith.constant 0 : index
    %c136_159 = arith.constant 136 : index
    %298 = vector.load %arg6[%c0_158, %c136_159] : memref<8x265xf32, #tpu.memory_space<vmem>>, vector<8x128xf32>
    %299 = vector.extract_strided_slice %3 {offsets = [7, 0], sizes = [1, 128], strides = [1, 1]} : vector<9x128xf32> to vector<1x128xf32>
    %300 = vector.broadcast %299 : vector<1x128xf32> to vector<8x128xf32>
    %301 = arith.mulf %298, %300 : vector<8x128xf32>
    %c0_160 = arith.constant 0 : index
    %c240 = arith.constant 240 : index
    %302 = vector.load %arg3[%c0_160, %c240] : memref<8x256xbf16, #tpu.memory_space<vmem>>, vector<8x8xbf16>
    %303 = arith.truncf %301 : vector<8x128xf32> to vector<8x128xbf16>
    %cst_161 = arith.constant dense<0.000000e+00> : vector<8x128xf32>
    %304 = tpu.matmul %302, %303, %cst_161 {dimension_numbers = #tpu.dot_dimension_numbers<[1], [0], [0], [1], [0, 0, 1, 1], [], []>} : vector<8x8xbf16>, vector<8x128xbf16>, vector<8x128xf32> -> vector<8x128xf32>
    %305 = arith.addf %297, %304 : vector<8x128xf32>
    %c0_162 = arith.constant 0 : index
    %c137_163 = arith.constant 137 : index
    %306 = vector.load %arg6[%c0_162, %c137_163] : memref<8x265xf32, #tpu.memory_space<vmem>>, vector<8x128xf32>
    %307 = vector.extract_strided_slice %3 {offsets = [8, 0], sizes = [1, 128], strides = [1, 1]} : vector<9x128xf32> to vector<1x128xf32>
    %308 = vector.broadcast %307 : vector<1x128xf32> to vector<8x128xf32>
    %309 = arith.mulf %306, %308 : vector<8x128xf32>
    %c0_164 = arith.constant 0 : index
    %c248 = arith.constant 248 : index
    %310 = vector.load %arg3[%c0_164, %c248] : memref<8x256xbf16, #tpu.memory_space<vmem>>, vector<8x8xbf16>
    %311 = arith.truncf %309 : vector<8x128xf32> to vector<8x128xbf16>
    %cst_165 = arith.constant dense<0.000000e+00> : vector<8x128xf32>
    %312 = tpu.matmul %310, %311, %cst_165 {dimension_numbers = #tpu.dot_dimension_numbers<[1], [0], [0], [1], [0, 0, 1, 1], [], []>} : vector<8x8xbf16>, vector<8x128xbf16>, vector<8x128xf32> -> vector<8x128xf32>
    %313 = arith.addf %305, %312 : vector<8x128xf32>
    %c0_166 = arith.constant 0 : index
    %c4_167 = arith.constant 4 : index
    %314 = vector.load %arg4[%c0_166, %c4_167] : memref<8x5xf32, #tpu.memory_space<vmem>>, vector<8x1xf32>
    %315 = vector.broadcast %314 : vector<8x1xf32> to vector<8x128xf32>
    %316 = arith.addf %313, %315 : vector<8x128xf32>
    %cst_168 = arith.constant 0.000000e+00 : f32
    %317 = vector.broadcast %cst_168 : f32 to vector<8x128xf32>
    %318 = arith.maximumf %316, %317 : vector<8x128xf32>
    %319 = arith.addf %166, %318 : vector<8x128xf32>
    %c0_169 = arith.constant 0 : index
    %c0_170 = arith.constant 0 : index
    %c0_171 = arith.constant 0 : index
    %320 = vector.load %arg5[%c0_169, %c0_170, %c0_171] : memref<1x8x128xf32, #tpu.memory_space<vmem>>, vector<1x8x128xf32>
    %321 = vector.shape_cast %320 : vector<1x8x128xf32> to vector<8x128xf32>
    %322 = vector.shape_cast %319 : vector<8x128xf32> to vector<1x8x128xf32>
    tpu.vector_store %arg5[%c0_169, %c0_170, %c0_171], %322 {strides = array<i32>} : memref<1x8x128xf32, #tpu.memory_space<vmem>>, vector<1x8x128xf32>,
    return
  }
  func.func @transform_0(%arg0: i32) -> (i32, i32, i32) {
    %c0_i32 = arith.constant 0 : i32
    %c0_i32_0 = arith.constant 0 : i32
    %c0_i32_1 = arith.constant 0 : i32
    return %arg0, %c0_i32, %c0_i32_0 : i32, i32, i32
  }
  func.func @transform_1(%arg0: i32) -> (i32, i32) {
    %c0_i32 = arith.constant 0 : i32
    %c0_i32_0 = arith.constant 0 : i32
    %c0_i32_1 = arith.constant 0 : i32
    return %c0_i32, %c0_i32_0 : i32, i32
  }
  func.func @transform_2(%arg0: i32) -> (i32, i32) {
    %c0_i32 = arith.constant 0 : i32
    %c0_i32_0 = arith.constant 0 : i32
    %c0_i32_1 = arith.constant 0 : i32
    return %c0_i32, %c0_i32_0 : i32, i32
  }
  func.func @transform_3(%arg0: i32) -> (i32, i32) {
    %c0_i32 = arith.constant 0 : i32
    %c0_i32_0 = arith.constant 0 : i32
    %c0_i32_1 = arith.constant 0 : i32
    return %c0_i32, %c0_i32_0 : i32, i32
  }
  func.func @transform_4(%arg0: i32) -> (i32, i32, i32) {
    %c0_i32 = arith.constant 0 : i32
    %c0_i32_0 = arith.constant 0 : i32
    %c0_i32_1 = arith.constant 0 : i32
    return %arg0, %c0_i32, %c0_i32_0 : i32, i32, i32
  }
}

</mosaic_0001>

<llo_original>
// kernel: tile.7
$region0: #{tile.7}
  %s0 = inlined_call_operand.vmem [shape: f32[9,2,64], index: 0, kind: input, shape index: {}]
  %s1 = inlined_call_operand.vmem [shape: f32[9,128], index: 1, kind: output, shape index: {}]
  $region1: #{tile.7} parent=0
    #allocation0 [shape = 'u8[36864]{0}', space=vmem, size = 0x9000, scoped, tag = 'scoped mem for input reshape']
    %s3 = ssub.s32 4, 1
    %s4 = scalar_lea.vmem %s0, 16
    %v5 = vld [vmem:[%s4] sm:%s3]
    %s6 = scalar_lea.vmem [#allocation0], 64
    %7 = vst [vmem:[%s6] sm:%s3] %v5
    %s8 = scalar_lea.vmem %s0, 14
    %v9 = vld [vmem:[%s8] sm:%s3]
    %s10 = scalar_lea.vmem [#allocation0], 56
    %11 = vst [vmem:[%s10] sm:%s3] %v9
    %s12 = scalar_lea.vmem %s0, 12
    %v13 = vld [vmem:[%s12] sm:%s3]
    %s14 = scalar_lea.vmem [#allocation0], 48
    %15 = vst [vmem:[%s14] sm:%s3] %v13
    %s16 = scalar_lea.vmem %s0, 10
    %v17 = vld [vmem:[%s16] sm:%s3]
    %s18 = scalar_lea.vmem [#allocation0], 40
    %19 = vst [vmem:[%s18] sm:%s3] %v17
    %s20 = scalar_lea.vmem %s0, 8
    %v21 = vld [vmem:[%s20] sm:%s3]
    %s22 = scalar_lea.vmem [#allocation0], 32
    %23 = vst [vmem:[%s22] sm:%s3] %v21
    %s24 = scalar_lea.vmem %s0, 6
    %v25 = vld [vmem:[%s24] sm:%s3]
    %s26 = scalar_lea.vmem [#allocation0], 24
    %27 = vst [vmem:[%s26] sm:%s3] %v25
    %s28 = scalar_lea.vmem %s0, 4
    %v29 = vld [vmem:[%s28] sm:%s3]
    %s30 = scalar_lea.vmem [#allocation0], 16
    %31 = vst [vmem:[%s30] sm:%s3] %v29
    %s32 = scalar_lea.vmem %s0, 2
    %v33 = vld [vmem:[%s32] sm:%s3]
    %s34 = scalar_lea.vmem [#allocation0], 8
    %35 = vst [vmem:[%s34] sm:%s3] %v33
    %v36 = vld [vmem:[%s0] sm:%s3]
    %37 = vst [vmem:[#allocation0] sm:%s3] %v36
    %v38 = vld [vmem:[#allocation0] ss:$8 sm:$0xf]
    %v39 = vld [vmem:[#allocation0] ss:$8 sm:$0xf0]
    %vm40 = vcmask 1047556
    %v41 = vsel %vm40, %v39, %v38
    %vm42 = vcmask 523264
    %43 = vst.msk [vmem:[%s1] sm:$0xff] %vm42, %v41
    %s44 = scalar_lea.vmem [#allocation0], 64
    %v45 = vld [vmem:[%s44] sm:$0x1]
    %vm46 = vcmask 523264
    %s47 = scalar_lea.vmem %s1, 8
    %48 = vst.msk [vmem:[%s47] sm:$0x1] %vm46, %v45
    %s49 = scalar_lea.vmem [#allocation0], 1
    %v50 = vld [vmem:[%s49] ss:$8 sm:$0xf]
    %s51 = scalar_lea.vmem [#allocation0], 1
    %v52 = vld [vmem:[%s51] ss:$8 sm:$0xf0]
    %vm53 = vcmask 1047556
    %v54 = vsel %vm53, %v52, %v50
    %55 = vrot.lane.b32.xlu0 %v54, 64
    %v56 = vpop.permute.xlu0 %55
    %vm57 = vcmask 1048064
    %58 = vst.msk [vmem:[%s1] sm:$0xff] %vm57, %v56
    %s59 = scalar_lea.vmem [#allocation0], 65
    %v60 = vld [vmem:[%s59] sm:$0x1]
    %61 = vrot.lane.b32.xlu0 %v60, 64
    %v62 = vpop.permute.xlu0 %61
    %vm63 = vcmask 1048064
    %s64 = scalar_lea.vmem %s1, 8
    %65 = vst.msk [vmem:[%s64] sm:$0x1] %vm63, %v62

// kernel: encoder_block_forward.1
$region0: #{encoder_block_forward.1}
  #allocation0 [shape = 'u32[]', space=smem, size = 0x4, offset = 0x4, fixed_abs, tag = 'smem constant byte address 0x4 - core index']
  #allocation1 [shape = 'u32[72,128]{1,0:T(1,128)}', space=vmem, size = 0x9000, scoped, tag = 'internal scratch']
  #allocation2 [shape = 'f32[8,265]{1,0:T(8,128)}', space=vmem, size = 0x3000, scoped, tag = 'scratch operand']
  %s0 = inlined_call_operand.vmem [shape: f32[1,4,128], index: 0, kind: input, shape index: {}]
  %s1 = inlined_call_operand.vmem [shape: f32[9,128], index: 1, kind: input, shape index: {}]
  %s2 = inlined_call_operand.vmem [shape: bf16[8,256], index: 2, kind: input, shape index: {}]
  %s3 = inlined_call_operand.vmem [shape: f32[8,5], index: 3, kind: input, shape index: {}]
  %s4 = inlined_call_operand.vmem [shape: f32[1,8,128], index: 4, kind: output, shape index: {}]
  %s5 = sld [smem:[#allocation0]]
  $region30: #{encoder_block_forward.1} parent=0
    _
  %s7 = ssub.s32 1, %s5
  %s8 = scalar_select 0, %s7, %s5
  // Predicated region
  $region2: #{encoder_block_forward.1} parent=0 // pred_check
    _
  $region3: #{encoder_block_forward.1} parent=0 // pred_check_branch
    %10 = sbr.rel (0) target = $region5
  $region4: #{encoder_block_forward.1} parent=0 // pred_region
    _
  $region5: #{encoder_block_forward.1} parent=0 // pred_fallthru
    _
  // Predicated region
  $region6: #{encoder_block_forward.1} parent=0 // pred_check
    _
  $region7: #{encoder_block_forward.1} parent=0 // pred_check_branch
    %12 = sbr.rel (0) target = $region9
  $region8: #{encoder_block_forward.1} parent=0 // pred_region
    _
  $region9: #{encoder_block_forward.1} parent=0 // pred_fallthru
    _
  // Predicated region
  $region10: #{encoder_block_forward.1} parent=0 // pred_check
    _
  $region11: #{encoder_block_forward.1} parent=0 // pred_check_branch
    %14 = sbr.rel (0) target = $region13
  $region12: #{encoder_block_forward.1} parent=0 // pred_region
    _
  $region13: #{encoder_block_forward.1} parent=0 // pred_fallthru
    _
  // Predicated region
  $region14: #{encoder_block_forward.1} parent=0 // pred_check
    _
  $region15: #{encoder_block_forward.1} parent=0 // pred_check_branch
    %16 = sbr.rel (0) target = $region17
  $region16: #{encoder_block_forward.1} parent=0 // pred_region
    _
  $region17: #{encoder_block_forward.1} parent=0 // pred_fallthru
    _
  %p18 = scmp.eq.s32.totalorder 0, 0
  // Predicated region
  $region18: #{encoder_block_forward.1} parent=0 // pred_check
    %p19 = pneg %p18
  $region19: #{encoder_block_forward.1} parent=0 // pred_check_branch
    %21 = sbr.rel (%p19) target = $region21
  $region20: #{encoder_block_forward.1} parent=0 // pred_region
    %22 = vst [vmem:[#allocation2] sm:$0xff] 0.0
    %vm23 = vcmask 72704
    %24 = vst.msk [vmem:[#allocation2 + $0x10] sm:$0xff] %vm23, 0.0
  $region21: #{encoder_block_forward.1} parent=0 // pred_fallthru
    _
  %v25 = vld [vmem:[%s1] sm:$0xff]
  %v26 = vld [vmem:[%s1 + $0x8] sm:$0x1]
  %v27 = vld [vmem:[%s0] sm:$0xf]
  %v28 = vld [vmem:[%s2] sm:$0xf]
  %v29 = vpack.c.bf16 %v27, %v27
  %v30 = vld [vmem:[%s3] sm:$0xff]
  %32 = vset.pattern.permute.xlu0 0
  %33 = vperm.xlu0 %32, %v30
  %v34 = vpop.permute.xlu0 %33
  %vm36 = vcmask 31744
  %v38 = vsel %vm36, %v28, 0
  %vm40 = vcmask 1041408
  %v42 = vsel %vm40, %v29, 0
  %44 = vmatpush.bf16.msra.mxu0 0
  %45 = vmatpush.bf16.msra.mxu0 0
  %46 = vmatpush.bf16.msra.mxu0 0
  %47 = vmatpush.bf16.msra.mxu0 0
  %48 = vmatpush.bf16.msra.mxu0 0
  %49 = vmatpush.bf16.msra.mxu0 0
  %50 = vmatpush.bf16.msra.mxu0 0
  %51 = vmatpush.bf16.msra.mxu0 %v42
  %52 = vmatmul.bf16.gmra.mxu0 %v38
  %v53 = vpop.f32.mrf.mxu0
  %v54 = vadd.f32 %v34, %v53
  %v55 = vpop.f32.mrf.mxu0
  %56 = vdwg.mxu0
  %v57 = vmax.f32 %v54, 0.0
  %58 = vst [vmem:[#allocation2 + $0x8] sm:$0xf] %v27
  %v59 = vld [vmem:[#allocation2] sm:$0xf]
  %v60 = vld [vmem:[#allocation2 + $0x8] sm:$0xf]
  %v61 = vperm.slane %v25, 0
  %63 = vrot.lane.b32.xlu0 %v61, 119
  %v64 = vpop.permute.xlu0 %63
  %v66 = vmul.f32 %v59, %v64
  %v67 = vmul.f32 %v60, %v64
  %v68 = vld [vmem:[%s2] sm:$0xf]
  %v69 = vpack.c.bf16 %v66, %v66
  %v70 = vpack.c.bf16 %v67, %v67
  %v71 = vperm.slane %v25, 1
  %73 = vrot.lane.b32.xlu0 %v71, 120
  %v74 = vpop.permute.xlu0 %73
  %v76 = vmul.f32 %v59, %v74
  %v77 = vmul.f32 %v60, %v74
  %v78 = vpack.c.bf16 %v76, %v76
  %v79 = vpack.c.bf16 %v77, %v77
  %v81 = vunpack.c.l.b16 %v68
  %v82 = vpack.c.b16 %v81, %v81
  %83 = vrot.lane.b32.xlu0 %v82, 120
  %v84 = vpop.permute.xlu0 %83
  %87 = vrot.lane.b32.xlu0 %v78, 8
  %v88 = vpop.permute.xlu0 %87
  %89 = vrot.lane.b32.xlu0 %v79, 8
  %v90 = vpop.permute.xlu0 %89
  %vm91 = vcmask 64512
  %v92 = vsel %vm91, %v88, %v90
  %v94 = vsel %vm36, %v84, 0
  %v97 = vsel %vm40, %v92, 0
  %99 = vmatpush.bf16.msra.mxu0 0
  %100 = vmatpush.bf16.msra.mxu0 0
  %101 = vmatpush.bf16.msra.mxu0 0
  %102 = vmatpush.bf16.msra.mxu0 0
  %103 = vmatpush.bf16.msra.mxu0 0
  %104 = vmatpush.bf16.msra.mxu0 0
  %105 = vmatpush.bf16.msra.mxu0 0
  %106 = vmatpush.bf16.msra.mxu0 %v97
  %107 = vmatmul.bf16.gmra.mxu0 %v94
  %v108 = vpop.f32.mrf.mxu0
  %v109 = vadd.f32 0.0, %v108
  %v110 = vpop.f32.mrf.mxu0
  %111 = vdwg.mxu0
  %112 = vrot.lane.b32.xlu0 %v82, 124
  %v113 = vpop.permute.xlu0 %112
  %116 = vrot.lane.b32.xlu0 %v69, 9
  %v117 = vpop.permute.xlu0 %116
  %118 = vrot.lane.b32.xlu0 %v70, 9
  %v119 = vpop.permute.xlu0 %118
  %vm120 = vcmask 72704
  %v121 = vsel %vm120, %v117, %v119
  %v123 = vsel %vm36, %v113, 0
  %v126 = vsel %vm40, %v121, 0
  %128 = vmatpush.bf16.msra.mxu0 0
  %129 = vmatpush.bf16.msra.mxu0 0
  %130 = vmatpush.bf16.msra.mxu0 0
  %131 = vmatpush.bf16.msra.mxu0 0
  %132 = vmatpush.bf16.msra.mxu0 0
  %133 = vmatpush.bf16.msra.mxu0 0
  %134 = vmatpush.bf16.msra.mxu0 0
  %135 = vmatpush.bf16.msra.mxu0 %v126
  %136 = vmatmul.bf16.gmra.mxu0 %v123
  %v137 = vpop.f32.mrf.mxu0
  %v138 = vadd.f32 %v109, %v137
  %v139 = vpop.f32.mrf.mxu0
  %140 = vdwg.mxu0
  %v141 = vperm.slane %v25, 2
  %143 = vrot.lane.b32.xlu0 %v141, 121
  %v144 = vpop.permute.xlu0 %143
  %v146 = vmul.f32 %v59, %v144
  %v147 = vmul.f32 %v60, %v144
  %v148 = vpack.c.bf16 %v146, %v146
  %v149 = vpack.c.bf16 %v147, %v147
  %150 = vrot.lane.b32.xlu0 %v82, 116
  %v151 = vpop.permute.xlu0 %150
  %154 = vrot.lane.b32.xlu0 %v148, 7
  %v155 = vpop.permute.xlu0 %154
  %156 = vrot.lane.b32.xlu0 %v149, 7
  %v157 = vpop.permute.xlu0 %156
  %vm158 = vcmask 56320
  %v159 = vsel %vm158, %v155, %v157
  %v161 = vsel %vm36, %v151, 0
  %v164 = vsel %vm40, %v159, 0
  %166 = vmatpush.bf16.msra.mxu0 0
  %167 = vmatpush.bf16.msra.mxu0 0
  %168 = vmatpush.bf16.msra.mxu0 0
  %169 = vmatpush.bf16.msra.mxu0 0
  %170 = vmatpush.bf16.msra.mxu0 0
  %171 = vmatpush.bf16.msra.mxu0 0
  %172 = vmatpush.bf16.msra.mxu0 0
  %173 = vmatpush.bf16.msra.mxu0 %v164
  %174 = vmatmul.bf16.gmra.mxu0 %v161
  %v175 = vpop.f32.mrf.mxu0
  %v176 = vadd.f32 0.0, %v175
  %v177 = vpop.f32.mrf.mxu0
  %178 = vdwg.mxu0
  %v179 = vadd.f32 %v138, %v176
  %v180 = vperm.slane %v25, 3
  %182 = vrot.lane.b32.xlu0 %v180, 127
  %v183 = vpop.permute.xlu0 %182
  %v185 = vmul.f32 %v59, %v183
  %v186 = vmul.f32 %v60, %v183
  %v187 = vpack.c.bf16 %v185, %v185
  %v188 = vpack.c.bf16 %v186, %v186
  %189 = vrot.lane.b32.xlu0 %v82, 112
  %v190 = vpop.permute.xlu0 %189
  %193 = vrot.lane.b32.xlu0 %v187, 1
  %v194 = vpop.permute.xlu0 %193
  %195 = vrot.lane.b32.xlu0 %v188, 1
  %v196 = vpop.permute.xlu0 %195
  %vm197 = vcmask 7168
  %v198 = vsel %vm197, %v194, %v196
  %v200 = vsel %vm36, %v190, 0
  %v203 = vsel %vm40, %v198, 0
  %205 = vmatpush.bf16.msra.mxu0 0
  %206 = vmatpush.bf16.msra.mxu0 0
  %207 = vmatpush.bf16.msra.mxu0 0
  %208 = vmatpush.bf16.msra.mxu0 0
  %209 = vmatpush.bf16.msra.mxu0 0
  %210 = vmatpush.bf16.msra.mxu0 0
  %211 = vmatpush.bf16.msra.mxu0 0
  %212 = vmatpush.bf16.msra.mxu0 %v203
  %213 = vmatmul.bf16.gmra.mxu0 %v200
  %v214 = vpop.f32.mrf.mxu0
  %v215 = vadd.f32 0.0, %v214
  %v216 = vpop.f32.mrf.mxu0
  %217 = vdwg.mxu0
  %v218 = vadd.f32 %v179, %v215
  %v219 = vpack.c.bf16 %v60, %v60
  %220 = vrot.lane.b32.xlu0 %v82, 108
  %v221 = vpop.permute.xlu0 %220
  %v223 = vsel %vm36, %v221, 0
  %v226 = vsel %vm40, %v219, 0
  %228 = vmatpush.bf16.msra.mxu0 0
  %229 = vmatpush.bf16.msra.mxu0 0
  %230 = vmatpush.bf16.msra.mxu0 0
  %231 = vmatpush.bf16.msra.mxu0 0
  %232 = vmatpush.bf16.msra.mxu0 0
  %233 = vmatpush.bf16.msra.mxu0 0
  %234 = vmatpush.bf16.msra.mxu0 0
  %235 = vmatpush.bf16.msra.mxu0 %v226
  %236 = vmatmul.bf16.gmra.mxu0 %v223
  %v237 = vpop.f32.mrf.mxu0
  %v238 = vadd.f32 0.0, %v237
  %v239 = vpop.f32.mrf.mxu0
  %240 = vdwg.mxu0
  %v241 = vadd.f32 %v218, %v238
  %v242 = vld [vmem:[#allocation2 + $0x8] sm:$0xf]
  %v243 = vld [vmem:[#allocation2 + $0x10] sm:$0xf]
  %v244 = vperm.slane %v25, 5
  %246 = vrot.lane.b32.xlu0 %v244, 1
  %v247 = vpop.permute.xlu0 %246
  %v249 = vmul.f32 %v242, %v247
  %v250 = vmul.f32 %v243, %v247
  %v251 = vpack.c.bf16 %v249, %v249
  %v252 = vpack.c.bf16 %v250, %v250
  %253 = vrot.lane.b32.xlu0 %v82, 104
  %v254 = vpop.permute.xlu0 %253
  %257 = vrot.lane.b32.xlu0 %v251, 127
  %v258 = vpop.permute.xlu0 %257
  %259 = vrot.lane.b32.xlu0 %v252, 127
  %v260 = vpop.permute.xlu0 %259
  %vm261 = vcmask 1039360
  %v262 = vsel %vm261, %v258, %v260
  %v264 = vsel %vm36, %v254, 0
  %v267 = vsel %vm40, %v262, 0
  %269 = vmatpush.bf16.msra.mxu0 0
  %270 = vmatpush.bf16.msra.mxu0 0
  %271 = vmatpush.bf16.msra.mxu0 0
  %272 = vmatpush.bf16.msra.mxu0 0
  %273 = vmatpush.bf16.msra.mxu0 0
  %274 = vmatpush.bf16.msra.mxu0 0
  %275 = vmatpush.bf16.msra.mxu0 0
  %276 = vmatpush.bf16.msra.mxu0 %v267
  %277 = vmatmul.bf16.gmra.mxu0 %v264
  %v278 = vpop.f32.mrf.mxu0
  %v279 = vadd.f32 0.0, %v278
  %v280 = vpop.f32.mrf.mxu0
  %281 = vdwg.mxu0
  %v282 = vadd.f32 %v241, %v279
  %v283 = vperm.slane %v25, 6
  %285 = vrot.lane.b32.xlu0 %v283, 7
  %v286 = vpop.permute.xlu0 %285
  %v288 = vmul.f32 %v242, %v286
  %v289 = vmul.f32 %v243, %v286
  %v290 = vpack.c.bf16 %v288, %v288
  %v291 = vpack.c.bf16 %v289, %v289
  %292 = vrot.lane.b32.xlu0 %v82, 100
  %v293 = vpop.permute.xlu0 %292
  %296 = vrot.lane.b32.xlu0 %v290, 121
  %v297 = vpop.permute.xlu0 %296
  %298 = vrot.lane.b32.xlu0 %v291, 121
  %v299 = vpop.permute.xlu0 %298
  %vm300 = vcmask 990208
  %v301 = vsel %vm300, %v297, %v299
  %v303 = vsel %vm36, %v293, 0
  %v306 = vsel %vm40, %v301, 0
  %308 = vmatpush.bf16.msra.mxu0 0
  %309 = vmatpush.bf16.msra.mxu0 0
  %310 = vmatpush.bf16.msra.mxu0 0
  %311 = vmatpush.bf16.msra.mxu0 0
  %312 = vmatpush.bf16.msra.mxu0 0
  %313 = vmatpush.bf16.msra.mxu0 0
  %314 = vmatpush.bf16.msra.mxu0 0
  %315 = vmatpush.bf16.msra.mxu0 %v306
  %316 = vmatmul.bf16.gmra.mxu0 %v303
  %v317 = vpop.f32.mrf.mxu0
  %v318 = vadd.f32 0.0, %v317
  %v319 = vpop.f32.mrf.mxu0
  %320 = vdwg.mxu0
  %v321 = vadd.f32 %v282, %v318
  %v322 = vperm.slane %v25, 7
  %324 = vrot.lane.b32.xlu0 %v322, 8
  %v325 = vpop.permute.xlu0 %324
  %v327 = vmul.f32 %v242, %v325
  %v328 = vmul.f32 %v243, %v325
  %v329 = vpack.c.bf16 %v327, %v327
  %v330 = vpack.c.bf16 %v328, %v328
  %331 = vrot.lane.b32.xlu0 %v82, 96
  %v332 = vpop.permute.xlu0 %331
  %335 = vrot.lane.b32.xlu0 %v329, 120
  %v336 = vpop.permute.xlu0 %335
  %337 = vrot.lane.b32.xlu0 %v330, 120
  %v338 = vpop.permute.xlu0 %337
  %vm339 = vcmask 982016
  %v340 = vsel %vm339, %v336, %v338
  %v342 = vsel %vm36, %v332, 0
  %v345 = vsel %vm40, %v340, 0
  %347 = vmatpush.bf16.msra.mxu0 0
  %348 = vmatpush.bf16.msra.mxu0 0
  %349 = vmatpush.bf16.msra.mxu0 0
  %350 = vmatpush.bf16.msra.mxu0 0
  %351 = vmatpush.bf16.msra.mxu0 0
  %352 = vmatpush.bf16.msra.mxu0 0
  %353 = vmatpush.bf16.msra.mxu0 0
  %354 = vmatpush.bf16.msra.mxu0 %v345
  %355 = vmatmul.bf16.gmra.mxu0 %v342
  %v356 = vpop.f32.mrf.mxu0
  %v357 = vadd.f32 0.0, %v356
  %v358 = vpop.f32.mrf.mxu0
  %359 = vdwg.mxu0
  %v360 = vadd.f32 %v321, %v357
  %v361 = vperm.slane %v26, 0
  %363 = vrot.lane.b32.xlu0 %v361, 9
  %v364 = vpop.permute.xlu0 %363
  %v366 = vmul.f32 %v242, %v364
  %v367 = vmul.f32 %v243, %v364
  %v368 = vpack.c.bf16 %v366, %v366
  %v369 = vpack.c.bf16 %v367, %v367
  %370 = vrot.lane.b32.xlu0 %v82, 92
  %v371 = vpop.permute.xlu0 %370
  %374 = vrot.lane.b32.xlu0 %v368, 119
  %v375 = vpop.permute.xlu0 %374
  %376 = vrot.lane.b32.xlu0 %v369, 119
  %v377 = vpop.permute.xlu0 %376
  %vm378 = vcmask 973824
  %v379 = vsel %vm378, %v375, %v377
  %v381 = vsel %vm36, %v371, 0
  %v384 = vsel %vm40, %v379, 0
  %386 = vmatpush.bf16.msra.mxu0 0
  %387 = vmatpush.bf16.msra.mxu0 0
  %388 = vmatpush.bf16.msra.mxu0 0
  %389 = vmatpush.bf16.msra.mxu0 0
  %390 = vmatpush.bf16.msra.mxu0 0
  %391 = vmatpush.bf16.msra.mxu0 0
  %392 = vmatpush.bf16.msra.mxu0 0
  %393 = vmatpush.bf16.msra.mxu0 %v384
  %394 = vmatmul.bf16.gmra.mxu0 %v381
  %v395 = vpop.f32.mrf.mxu0
  %v396 = vadd.f32 0.0, %v395
  %v397 = vpop.f32.mrf.mxu0
  %398 = vdwg.mxu0
  %v399 = vadd.f32 %v360, %v396
  %v400 = vld [vmem:[%s3] sm:$0xff]
  %402 = vset.pattern.permute.xlu0 1
  %403 = vperm.xlu0 %402, %v400
  %v404 = vpop.permute.xlu0 %403
  %v406 = vadd.f32 %v399, %v404
  %v407 = vmax.f32 %v406, 0.0
  %408 = vst [vmem:[#allocation2 + $0x8] sm:$0xff] %v407
  %v409 = vld [vmem:[#allocation2] sm:$0xff]
  %v410 = vld [vmem:[#allocation2 + $0x8] sm:$0xff]
  %v411 = vmul.f32 %v409, %v64
  %v412 = vmul.f32 %v410, %v64
  %v413 = vld [vmem:[%s2] sm:$0xf]
  %v414 = vpack.c.bf16 %v411, %v411
  %v415 = vpack.c.bf16 %v412, %v412
  %v416 = vmul.f32 %v409, %v74
  %v417 = vmul.f32 %v410, %v74
  %v418 = vpack.c.bf16 %v416, %v416
  %v419 = vpack.c.bf16 %v417, %v417
  %v421 = vunpack.c.l.b16 %v413
  %v422 = vpack.c.b16 %v421, %v421
  %423 = vrot.lane.b32.xlu0 %v422, 80
  %v424 = vpop.permute.xlu0 %423
  %427 = vrot.lane.b32.xlu0 %v418, 8
  %v428 = vpop.permute.xlu0 %427
  %429 = vrot.lane.b32.xlu0 %v419, 8
  %v430 = vpop.permute.xlu0 %429
  %v431 = vsel %vm91, %v428, %v430
  %vm432 = vcmask 64512
  %v434 = vsel %vm432, %v424, 0
  %vm436 = vcmask 1043456
  %v438 = vsel %vm436, %v431, 0
  %440 = vmatpush.bf16.msra.mxu0 0
  %441 = vmatpush.bf16.msra.mxu0 0
  %442 = vmatpush.bf16.msra.mxu0 0
  %443 = vmatpush.bf16.msra.mxu0 0
  %444 = vmatpush.bf16.msra.mxu0 0
  %445 = vmatpush.bf16.msra.mxu0 0
  %446 = vmatpush.bf16.msra.mxu0 0
  %447 = vmatpush.bf16.msra.mxu0 %v438
  %448 = vmatmul.bf16.gmra.mxu0 %v434
  %v449 = vpop.f32.mrf.mxu0
  %v450 = vadd.f32 0.0, %v449
  %v451 = vpop.f32.mrf.mxu0
  %452 = vdwg.mxu0
  %453 = vrot.lane.b32.xlu0 %v422, 88
  %v454 = vpop.permute.xlu0 %453
  %457 = vrot.lane.b32.xlu0 %v414, 9
  %v458 = vpop.permute.xlu0 %457
  %459 = vrot.lane.b32.xlu0 %v415, 9
  %v460 = vpop.permute.xlu0 %459
  %v461 = vsel %vm120, %v458, %v460
  %v463 = vsel %vm432, %v454, 0
  %v466 = vsel %vm436, %v461, 0
  %468 = vmatpush.bf16.msra.mxu0 0
  %469 = vmatpush.bf16.msra.mxu0 0
  %470 = vmatpush.bf16.msra.mxu0 0
  %471 = vmatpush.bf16.msra.mxu0 0
  %472 = vmatpush.bf16.msra.mxu0 0
  %473 = vmatpush.bf16.msra.mxu0 0
  %474 = vmatpush.bf16.msra.mxu0 0
  %475 = vmatpush.bf16.msra.mxu0 %v466
  %476 = vmatmul.bf16.gmra.mxu0 %v463
  %v477 = vpop.f32.mrf.mxu0
  %v478 = vadd.f32 %v450, %v477
  %v479 = vpop.f32.mrf.mxu0
  %480 = vdwg.mxu0
  %v481 = vmul.f32 %v409, %v144
  %v482 = vmul.f32 %v410, %v144
  %v483 = vpack.c.bf16 %v481, %v481
  %v484 = vpack.c.bf16 %v482, %v482
  %485 = vrot.lane.b32.xlu0 %v422, 72
  %v486 = vpop.permute.xlu0 %485
  %489 = vrot.lane.b32.xlu0 %v483, 7
  %v490 = vpop.permute.xlu0 %489
  %491 = vrot.lane.b32.xlu0 %v484, 7
  %v492 = vpop.permute.xlu0 %491
  %v493 = vsel %vm158, %v490, %v492
  %v495 = vsel %vm432, %v486, 0
  %v498 = vsel %vm436, %v493, 0
  %500 = vmatpush.bf16.msra.mxu0 0
  %501 = vmatpush.bf16.msra.mxu0 0
  %502 = vmatpush.bf16.msra.mxu0 0
  %503 = vmatpush.bf16.msra.mxu0 0
  %504 = vmatpush.bf16.msra.mxu0 0
  %505 = vmatpush.bf16.msra.mxu0 0
  %506 = vmatpush.bf16.msra.mxu0 0
  %507 = vmatpush.bf16.msra.mxu0 %v498
  %508 = vmatmul.bf16.gmra.mxu0 %v495
  %v509 = vpop.f32.mrf.mxu0
  %v510 = vadd.f32 0.0, %v509
  %v511 = vpop.f32.mrf.mxu0
  %512 = vdwg.mxu0
  %v513 = vadd.f32 %v478, %v510
  %v514 = vmul.f32 %v409, %v183
  %v515 = vmul.f32 %v410, %v183
  %v516 = vpack.c.bf16 %v514, %v514
  %v517 = vpack.c.bf16 %v515, %v515
  %518 = vrot.lane.b32.xlu0 %v422, 64
  %v519 = vpop.permute.xlu0 %518
  %522 = vrot.lane.b32.xlu0 %v516, 1
  %v523 = vpop.permute.xlu0 %522
  %524 = vrot.lane.b32.xlu0 %v517, 1
  %v525 = vpop.permute.xlu0 %524
  %v526 = vsel %vm197, %v523, %v525
  %v528 = vsel %vm432, %v519, 0
  %v531 = vsel %vm436, %v526, 0
  %533 = vmatpush.bf16.msra.mxu0 0
  %534 = vmatpush.bf16.msra.mxu0 0
  %535 = vmatpush.bf16.msra.mxu0 0
  %536 = vmatpush.bf16.msra.mxu0 0
  %537 = vmatpush.bf16.msra.mxu0 0
  %538 = vmatpush.bf16.msra.mxu0 0
  %539 = vmatpush.bf16.msra.mxu0 0
  %540 = vmatpush.bf16.msra.mxu0 %v531
  %541 = vmatmul.bf16.gmra.mxu0 %v528
  %v542 = vpop.f32.mrf.mxu0
  %v543 = vadd.f32 0.0, %v542
  %v544 = vpop.f32.mrf.mxu0
  %545 = vdwg.mxu0
  %v546 = vadd.f32 %v513, %v543
  %v547 = vpack.c.bf16 %v410, %v410
  %548 = vrot.lane.b32.xlu0 %v422, 56
  %v549 = vpop.permute.xlu0 %548
  %v551 = vsel %vm432, %v549, 0
  %v554 = vsel %vm436, %v547, 0
  %556 = vmatpush.bf16.msra.mxu0 0
  %557 = vmatpush.bf16.msra.mxu0 0
  %558 = vmatpush.bf16.msra.mxu0 0
  %559 = vmatpush.bf16.msra.mxu0 0
  %560 = vmatpush.bf16.msra.mxu0 0
  %561 = vmatpush.bf16.msra.mxu0 0
  %562 = vmatpush.bf16.msra.mxu0 0
  %563 = vmatpush.bf16.msra.mxu0 %v554
  %564 = vmatmul.bf16.gmra.mxu0 %v551
  %v565 = vpop.f32.mrf.mxu0
  %v566 = vadd.f32 0.0, %v565
  %v567 = vpop.f32.mrf.mxu0
  %568 = vdwg.mxu0
  %v569 = vadd.f32 %v546, %v566
  %v570 = vld [vmem:[#allocation2 + $0x8] sm:$0xff]
  %v571 = vld [vmem:[#allocation2 + $0x10] sm:$0xff]
  %v572 = vmul.f32 %v570, %v247
  %v573 = vmul.f32 %v571, %v247
  %v574 = vpack.c.bf16 %v572, %v572
  %v575 = vpack.c.bf16 %v573, %v573
  %576 = vrot.lane.b32.xlu0 %v422, 48
  %v577 = vpop.permute.xlu0 %576
  %580 = vrot.lane.b32.xlu0 %v574, 127
  %v581 = vpop.permute.xlu0 %580
  %582 = vrot.lane.b32.xlu0 %v575, 127
  %v583 = vpop.permute.xlu0 %582
  %v584 = vsel %vm261, %v581, %v583
  %v586 = vsel %vm432, %v577, 0
  %v589 = vsel %vm436, %v584, 0
  %591 = vmatpush.bf16.msra.mxu0 0
  %592 = vmatpush.bf16.msra.mxu0 0
  %593 = vmatpush.bf16.msra.mxu0 0
  %594 = vmatpush.bf16.msra.mxu0 0
  %595 = vmatpush.bf16.msra.mxu0 0
  %596 = vmatpush.bf16.msra.mxu0 0
  %597 = vmatpush.bf16.msra.mxu0 0
  %598 = vmatpush.bf16.msra.mxu0 %v589
  %599 = vmatmul.bf16.gmra.mxu0 %v586
  %v600 = vpop.f32.mrf.mxu0
  %v601 = vadd.f32 0.0, %v600
  %v602 = vpop.f32.mrf.mxu0
  %603 = vdwg.mxu0
  %v604 = vadd.f32 %v569, %v601
  %v605 = vmul.f32 %v570, %v286
  %v606 = vmul.f32 %v571, %v286
  %v607 = vpack.c.bf16 %v605, %v605
  %v608 = vpack.c.bf16 %v606, %v606
  %609 = vrot.lane.b32.xlu0 %v422, 40
  %v610 = vpop.permute.xlu0 %609
  %613 = vrot.lane.b32.xlu0 %v607, 121
  %v614 = vpop.permute.xlu0 %613
  %615 = vrot.lane.b32.xlu0 %v608, 121
  %v616 = vpop.permute.xlu0 %615
  %v617 = vsel %vm300, %v614, %v616
  %v619 = vsel %vm432, %v610, 0
  %v622 = vsel %vm436, %v617, 0
  %624 = vmatpush.bf16.msra.mxu0 0
  %625 = vmatpush.bf16.msra.mxu0 0
  %626 = vmatpush.bf16.msra.mxu0 0
  %627 = vmatpush.bf16.msra.mxu0 0
  %628 = vmatpush.bf16.msra.mxu0 0
  %629 = vmatpush.bf16.msra.mxu0 0
  %630 = vmatpush.bf16.msra.mxu0 0
  %631 = vmatpush.bf16.msra.mxu0 %v622
  %632 = vmatmul.bf16.gmra.mxu0 %v619
  %v633 = vpop.f32.mrf.mxu0
  %v634 = vadd.f32 0.0, %v633
  %v635 = vpop.f32.mrf.mxu0
  %636 = vdwg.mxu0
  %v637 = vadd.f32 %v604, %v634
  %v638 = vmul.f32 %v570, %v325
  %v639 = vmul.f32 %v571, %v325
  %v640 = vpack.c.bf16 %v638, %v638
  %v641 = vpack.c.bf16 %v639, %v639
  %642 = vrot.lane.b32.xlu0 %v422, 32
  %v643 = vpop.permute.xlu0 %642
  %646 = vrot.lane.b32.xlu0 %v640, 120
  %v647 = vpop.permute.xlu0 %646
  %648 = vrot.lane.b32.xlu0 %v641, 120
  %v649 = vpop.permute.xlu0 %648
  %v650 = vsel %vm339, %v647, %v649
  %v652 = vsel %vm432, %v643, 0
  %v655 = vsel %vm436, %v650, 0
  %657 = vmatpush.bf16.msra.mxu0 0
  %658 = vmatpush.bf16.msra.mxu0 0
  %659 = vmatpush.bf16.msra.mxu0 0
  %660 = vmatpush.bf16.msra.mxu0 0
  %661 = vmatpush.bf16.msra.mxu0 0
  %662 = vmatpush.bf16.msra.mxu0 0
  %663 = vmatpush.bf16.msra.mxu0 0
  %664 = vmatpush.bf16.msra.mxu0 %v655
  %665 = vmatmul.bf16.gmra.mxu0 %v652
  %v666 = vpop.f32.mrf.mxu0
  %v667 = vadd.f32 0.0, %v666
  %v668 = vpop.f32.mrf.mxu0
  %669 = vdwg.mxu0
  %v670 = vadd.f32 %v637, %v667
  %v671 = vmul.f32 %v570, %v364
  %v672 = vmul.f32 %v571, %v364
  %v673 = vpack.c.bf16 %v671, %v671
  %v674 = vpack.c.bf16 %v672, %v672
  %675 = vrot.lane.b32.xlu0 %v422, 24
  %v676 = vpop.permute.xlu0 %675
  %679 = vrot.lane.b32.xlu0 %v673, 119
  %v680 = vpop.permute.xlu0 %679
  %681 = vrot.lane.b32.xlu0 %v674, 119
  %v682 = vpop.permute.xlu0 %681
  %v683 = vsel %vm378, %v680, %v682
  %v685 = vsel %vm432, %v676, 0
  %v688 = vsel %vm436, %v683, 0
  %690 = vmatpush.bf16.msra.mxu0 0
  %691 = vmatpush.bf16.msra.mxu0 0
  %692 = vmatpush.bf16.msra.mxu0 0
  %693 = vmatpush.bf16.msra.mxu0 0
  %694 = vmatpush.bf16.msra.mxu0 0
  %695 = vmatpush.bf16.msra.mxu0 0
  %696 = vmatpush.bf16.msra.mxu0 0
  %697 = vmatpush.bf16.msra.mxu0 %v688
  %698 = vmatmul.bf16.gmra.mxu0 %v685
  %v699 = vpop.f32.mrf.mxu0
  %v700 = vadd.f32 0.0, %v699
  %v701 = vpop.f32.mrf.mxu0
  %702 = vdwg.mxu0
  %v703 = vadd.f32 %v670, %v700
  %v704 = vld [vmem:[%s3] sm:$0xff]
  %706 = vset.pattern.permute.xlu0 2
  %707 = vperm.xlu0 %706, %v704
  %v708 = vpop.permute.xlu0 %707
  %v710 = vadd.f32 %v703, %v708
  %v711 = vmax.f32 %v710, 0.0
  %v712 = vadd.f32 %v57, %v711
  %713 = vst [vmem:[#allocation2 + $0x8] sm:$0xff] %v712
  %v714 = vld [vmem:[#allocation2] sm:$0xff]
  %v715 = vld [vmem:[#allocation2 + $0x8] sm:$0xff]
  %v716 = vmul.f32 %v714, %v64
  %v717 = vmul.f32 %v715, %v64
  %v718 = vld [vmem:[%s2] sm:$0xf]
  %v719 = vpack.c.bf16 %v716, %v716
  %v720 = vpack.c.bf16 %v717, %v717
  %v721 = vmul.f32 %v714, %v74
  %v722 = vmul.f32 %v715, %v74
  %v723 = vpack.c.bf16 %v721, %v721
  %v724 = vpack.c.bf16 %v722, %v722
  %v726 = vunpack.c.l.b16 %v718
  %v727 = vpack.c.b16 %v726, %v726
  %728 = vrot.lane.b32.xlu0 %v727, 8
  %v729 = vpop.permute.xlu0 %728
  %732 = vrot.lane.b32.xlu0 %v723, 8
  %v733 = vpop.permute.xlu0 %732
  %734 = vrot.lane.b32.xlu0 %v724, 8
  %v735 = vpop.permute.xlu0 %734
  %v736 = vsel %vm91, %v733, %v735
  %v738 = vsel %vm432, %v729, 0
  %v741 = vsel %vm436, %v736, 0
  %743 = vmatpush.bf16.msra.mxu0 0
  %744 = vmatpush.bf16.msra.mxu0 0
  %745 = vmatpush.bf16.msra.mxu0 0
  %746 = vmatpush.bf16.msra.mxu0 0
  %747 = vmatpush.bf16.msra.mxu0 0
  %748 = vmatpush.bf16.msra.mxu0 0
  %749 = vmatpush.bf16.msra.mxu0 0
  %750 = vmatpush.bf16.msra.mxu0 %v741
  %751 = vmatmul.bf16.gmra.mxu0 %v738
  %v752 = vpop.f32.mrf.mxu0
  %v753 = vadd.f32 0.0, %v752
  %v754 = vpop.f32.mrf.mxu0
  %755 = vdwg.mxu0
  %756 = vrot.lane.b32.xlu0 %v727, 16
  %v757 = vpop.permute.xlu0 %756
  %760 = vrot.lane.b32.xlu0 %v719, 9
  %v761 = vpop.permute.xlu0 %760
  %762 = vrot.lane.b32.xlu0 %v720, 9
  %v763 = vpop.permute.xlu0 %762
  %v764 = vsel %vm120, %v761, %v763
  %v766 = vsel %vm432, %v757, 0
  %v769 = vsel %vm436, %v764, 0
  %771 = vmatpush.bf16.msra.mxu0 0
  %772 = vmatpush.bf16.msra.mxu0 0
  %773 = vmatpush.bf16.msra.mxu0 0
  %774 = vmatpush.bf16.msra.mxu0 0
  %775 = vmatpush.bf16.msra.mxu0 0
  %776 = vmatpush.bf16.msra.mxu0 0
  %777 = vmatpush.bf16.msra.mxu0 0
  %778 = vmatpush.bf16.msra.mxu0 %v769
  %779 = vmatmul.bf16.gmra.mxu0 %v766
  %v780 = vpop.f32.mrf.mxu0
  %v781 = vadd.f32 %v753, %v780
  %v782 = vpop.f32.mrf.mxu0
  %783 = vdwg.mxu0
  %v784 = vmul.f32 %v714, %v144
  %v785 = vmul.f32 %v715, %v144
  %v786 = vld [vmem:[%s2 + $0x4] sm:$0xf]
  %v787 = vpack.c.bf16 %v784, %v784
  %v788 = vpack.c.bf16 %v785, %v785
  %791 = vrot.lane.b32.xlu0 %v787, 7
  %v792 = vpop.permute.xlu0 %791
  %793 = vrot.lane.b32.xlu0 %v788, 7
  %v794 = vpop.permute.xlu0 %793
  %v795 = vsel %vm158, %v792, %v794
  %v797 = vsel %vm432, %v786, 0
  %v800 = vsel %vm436, %v795, 0
  %802 = vmatpush.bf16.msra.mxu0 0
  %803 = vmatpush.bf16.msra.mxu0 0
  %804 = vmatpush.bf16.msra.mxu0 0
  %805 = vmatpush.bf16.msra.mxu0 0
  %806 = vmatpush.bf16.msra.mxu0 0
  %807 = vmatpush.bf16.msra.mxu0 0
  %808 = vmatpush.bf16.msra.mxu0 0
  %809 = vmatpush.bf16.msra.mxu0 %v800
  %810 = vmatmul.bf16.gmra.mxu0 %v797
  %v811 = vpop.f32.mrf.mxu0
  %v812 = vadd.f32 0.0, %v811
  %v813 = vpop.f32.mrf.mxu0
  %814 = vdwg.mxu0
  %v815 = vadd.f32 %v781, %v812
  %v816 = vmul.f32 %v714, %v183
  %v817 = vmul.f32 %v715, %v183
  %v818 = vpack.c.bf16 %v816, %v816
  %v819 = vpack.c.bf16 %v817, %v817
  %v821 = vunpack.c.l.b16 %v786
  %v822 = vpack.c.b16 %v821, %v821
  %823 = vrot.lane.b32.xlu0 %v822, 120
  %v824 = vpop.permute.xlu0 %823
  %827 = vrot.lane.b32.xlu0 %v818, 1
  %v828 = vpop.permute.xlu0 %827
  %829 = vrot.lane.b32.xlu0 %v819, 1
  %v830 = vpop.permute.xlu0 %829
  %v831 = vsel %vm197, %v828, %v830
  %v833 = vsel %vm432, %v824, 0
  %v836 = vsel %vm436, %v831, 0
  %838 = vmatpush.bf16.msra.mxu0 0
  %839 = vmatpush.bf16.msra.mxu0 0
  %840 = vmatpush.bf16.msra.mxu0 0
  %841 = vmatpush.bf16.msra.mxu0 0
  %842 = vmatpush.bf16.msra.mxu0 0
  %843 = vmatpush.bf16.msra.mxu0 0
  %844 = vmatpush.bf16.msra.mxu0 0
  %845 = vmatpush.bf16.msra.mxu0 %v836
  %846 = vmatmul.bf16.gmra.mxu0 %v833
  %v847 = vpop.f32.mrf.mxu0
  %v848 = vadd.f32 0.0, %v847
  %v849 = vpop.f32.mrf.mxu0
  %850 = vdwg.mxu0
  %v851 = vadd.f32 %v815, %v848
  %v852 = vpack.c.bf16 %v715, %v715
  %853 = vrot.lane.b32.xlu0 %v822, 112
  %v854 = vpop.permute.xlu0 %853
  %v856 = vsel %vm432, %v854, 0
  %v859 = vsel %vm436, %v852, 0
  %861 = vmatpush.bf16.msra.mxu0 0
  %862 = vmatpush.bf16.msra.mxu0 0
  %863 = vmatpush.bf16.msra.mxu0 0
  %864 = vmatpush.bf16.msra.mxu0 0
  %865 = vmatpush.bf16.msra.mxu0 0
  %866 = vmatpush.bf16.msra.mxu0 0
  %867 = vmatpush.bf16.msra.mxu0 0
  %868 = vmatpush.bf16.msra.mxu0 %v859
  %869 = vmatmul.bf16.gmra.mxu0 %v856
  %v870 = vpop.f32.mrf.mxu0
  %v871 = vadd.f32 0.0, %v870
  %v872 = vpop.f32.mrf.mxu0
  %873 = vdwg.mxu0
  %v874 = vadd.f32 %v851, %v871
  %v875 = vld [vmem:[#allocation2 + $0x8] sm:$0xff]
  %v876 = vld [vmem:[#allocation2 + $0x10] sm:$0xff]
  %v877 = vmul.f32 %v875, %v247
  %v878 = vmul.f32 %v876, %v247
  %v879 = vpack.c.bf16 %v877, %v877
  %v880 = vpack.c.bf16 %v878, %v878
  %881 = vrot.lane.b32.xlu0 %v822, 104
  %v882 = vpop.permute.xlu0 %881
  %885 = vrot.lane.b32.xlu0 %v879, 127
  %v886 = vpop.permute.xlu0 %885
  %887 = vrot.lane.b32.xlu0 %v880, 127
  %v888 = vpop.permute.xlu0 %887
  %v889 = vsel %vm261, %v886, %v888
  %v891 = vsel %vm432, %v882, 0
  %v894 = vsel %vm436, %v889, 0
  %896 = vmatpush.bf16.msra.mxu0 0
  %897 = vmatpush.bf16.msra.mxu0 0
  %898 = vmatpush.bf16.msra.mxu0 0
  %899 = vmatpush.bf16.msra.mxu0 0
  %900 = vmatpush.bf16.msra.mxu0 0
  %901 = vmatpush.bf16.msra.mxu0 0
  %902 = vmatpush.bf16.msra.mxu0 0
  %903 = vmatpush.bf16.msra.mxu0 %v894
  %904 = vmatmul.bf16.gmra.mxu0 %v891
  %v905 = vpop.f32.mrf.mxu0
  %v906 = vadd.f32 0.0, %v905
  %v907 = vpop.f32.mrf.mxu0
  %908 = vdwg.mxu0
  %v909 = vadd.f32 %v874, %v906
  %v910 = vmul.f32 %v875, %v286
  %v911 = vmul.f32 %v876, %v286
  %v912 = vpack.c.bf16 %v910, %v910
  %v913 = vpack.c.bf16 %v911, %v911
  %914 = vrot.lane.b32.xlu0 %v822, 96
  %v915 = vpop.permute.xlu0 %914
  %918 = vrot.lane.b32.xlu0 %v912, 121
  %v919 = vpop.permute.xlu0 %918
  %920 = vrot.lane.b32.xlu0 %v913, 121
  %v921 = vpop.permute.xlu0 %920
  %v922 = vsel %vm300, %v919, %v921
  %v924 = vsel %vm432, %v915, 0
  %v927 = vsel %vm436, %v922, 0
  %929 = vmatpush.bf16.msra.mxu0 0
  %930 = vmatpush.bf16.msra.mxu0 0
  %931 = vmatpush.bf16.msra.mxu0 0
  %932 = vmatpush.bf16.msra.mxu0 0
  %933 = vmatpush.bf16.msra.mxu0 0
  %934 = vmatpush.bf16.msra.mxu0 0
  %935 = vmatpush.bf16.msra.mxu0 0
  %936 = vmatpush.bf16.msra.mxu0 %v927
  %937 = vmatmul.bf16.gmra.mxu0 %v924
  %v938 = vpop.f32.mrf.mxu0
  %v939 = vadd.f32 0.0, %v938
  %v940 = vpop.f32.mrf.mxu0
  %941 = vdwg.mxu0
  %v942 = vadd.f32 %v909, %v939
  %v943 = vmul.f32 %v875, %v325
  %v944 = vmul.f32 %v876, %v325
  %v945 = vpack.c.bf16 %v943, %v943
  %v946 = vpack.c.bf16 %v944, %v944
  %947 = vrot.lane.b32.xlu0 %v822, 88
  %v948 = vpop.permute.xlu0 %947
  %951 = vrot.lane.b32.xlu0 %v945, 120
  %v952 = vpop.permute.xlu0 %951
  %953 = vrot.lane.b32.xlu0 %v946, 120
  %v954 = vpop.permute.xlu0 %953
  %v955 = vsel %vm339, %v952, %v954
  %v957 = vsel %vm432, %v948, 0
  %v960 = vsel %vm436, %v955, 0
  %962 = vmatpush.bf16.msra.mxu0 0
  %963 = vmatpush.bf16.msra.mxu0 0
  %964 = vmatpush.bf16.msra.mxu0 0
  %965 = vmatpush.bf16.msra.mxu0 0
  %966 = vmatpush.bf16.msra.mxu0 0
  %967 = vmatpush.bf16.msra.mxu0 0
  %968 = vmatpush.bf16.msra.mxu0 0
  %969 = vmatpush.bf16.msra.mxu0 %v960
  %970 = vmatmul.bf16.gmra.mxu0 %v957
  %v971 = vpop.f32.mrf.mxu0
  %v972 = vadd.f32 0.0, %v971
  %v973 = vpop.f32.mrf.mxu0
  %974 = vdwg.mxu0
  %v975 = vadd.f32 %v942, %v972
  %v976 = vmul.f32 %v875, %v364
  %v977 = vmul.f32 %v876, %v364
  %v978 = vpack.c.bf16 %v976, %v976
  %v979 = vpack.c.bf16 %v977, %v977
  %980 = vrot.lane.b32.xlu0 %v822, 80
  %v981 = vpop.permute.xlu0 %980
  %984 = vrot.lane.b32.xlu0 %v978, 119
  %v985 = vpop.permute.xlu0 %984
  %986 = vrot.lane.b32.xlu0 %v979, 119
  %v987 = vpop.permute.xlu0 %986
  %v988 = vsel %vm378, %v985, %v987
  %v990 = vsel %vm432, %v981, 0
  %v993 = vsel %vm436, %v988, 0
  %995 = vmatpush.bf16.msra.mxu0 0
  %996 = vmatpush.bf16.msra.mxu0 0
  %997 = vmatpush.bf16.msra.mxu0 0
  %998 = vmatpush.bf16.msra.mxu0 0
  %999 = vmatpush.bf16.msra.mxu0 0
  %1000 = vmatpush.bf16.msra.mxu0 0
  %1001 = vmatpush.bf16.msra.mxu0 0
  %1002 = vmatpush.bf16.msra.mxu0 %v993
  %1003 = vmatmul.bf16.gmra.mxu0 %v990
  %v1004 = vpop.f32.mrf.mxu0
  %v1005 = vadd.f32 0.0, %v1004
  %v1006 = vpop.f32.mrf.mxu0
  %1007 = vdwg.mxu0
  %v1008 = vadd.f32 %v975, %v1005
  %v1009 = vld [vmem:[%s3] sm:$0xff]
  %1011 = vset.pattern.permute.xlu0 3
  %1012 = vperm.xlu0 %1011, %v1009
  %v1013 = vpop.permute.xlu0 %1012
  %v1015 = vadd.f32 %v1008, %v1013
  %v1016 = vmax.f32 %v1015, 0.0
  %1017 = vst [vmem:[#allocation2 + $0x8] sm:$0xff] %v1016
  %v1018 = vld [vmem:[#allocation2] sm:$0xff]
  %v1019 = vld [vmem:[#allocation2 + $0x8] sm:$0xff]
  %v1020 = vmul.f32 %v1018, %v64
  %v1021 = vmul.f32 %v1019, %v64
  %v1022 = vld [vmem:[%s2 + $0x4] sm:$0xf]
  %v1023 = vpack.c.bf16 %v1020, %v1020
  %v1024 = vpack.c.bf16 %v1021, %v1021
  %v1025 = vmul.f32 %v1018, %v74
  %v1026 = vmul.f32 %v1019, %v74
  %v1027 = vpack.c.bf16 %v1025, %v1025
  %v1028 = vpack.c.bf16 %v1026, %v1026
  %v1030 = vunpack.c.l.b16 %v1022
  %v1031 = vpack.c.b16 %v1030, %v1030
  %1032 = vrot.lane.b32.xlu0 %v1031, 64
  %v1033 = vpop.permute.xlu0 %1032
  %1036 = vrot.lane.b32.xlu0 %v1027, 8
  %v1037 = vpop.permute.xlu0 %1036
  %1038 = vrot.lane.b32.xlu0 %v1028, 8
  %v1039 = vpop.permute.xlu0 %1038
  %v1040 = vsel %vm91, %v1037, %v1039
  %v1042 = vsel %vm432, %v1033, 0
  %v1045 = vsel %vm436, %v1040, 0
  %1047 = vmatpush.bf16.msra.mxu0 0
  %1048 = vmatpush.bf16.msra.mxu0 0
  %1049 = vmatpush.bf16.msra.mxu0 0
  %1050 = vmatpush.bf16.msra.mxu0 0
  %1051 = vmatpush.bf16.msra.mxu0 0
  %1052 = vmatpush.bf16.msra.mxu0 0
  %1053 = vmatpush.bf16.msra.mxu0 0
  %1054 = vmatpush.bf16.msra.mxu0 %v1045
  %1055 = vmatmul.bf16.gmra.mxu0 %v1042
  %v1056 = vpop.f32.mrf.mxu0
  %v1057 = vadd.f32 0.0, %v1056
  %v1058 = vpop.f32.mrf.mxu0
  %1059 = vdwg.mxu0
  %1060 = vrot.lane.b32.xlu0 %v1031, 72
  %v1061 = vpop.permute.xlu0 %1060
  %1064 = vrot.lane.b32.xlu0 %v1023, 9
  %v1065 = vpop.permute.xlu0 %1064
  %1066 = vrot.lane.b32.xlu0 %v1024, 9
  %v1067 = vpop.permute.xlu0 %1066
  %v1068 = vsel %vm120, %v1065, %v1067
  %v1070 = vsel %vm432, %v1061, 0
  %v1073 = vsel %vm436, %v1068, 0
  %1075 = vmatpush.bf16.msra.mxu0 0
  %1076 = vmatpush.bf16.msra.mxu0 0
  %1077 = vmatpush.bf16.msra.mxu0 0
  %1078 = vmatpush.bf16.msra.mxu0 0
  %1079 = vmatpush.bf16.msra.mxu0 0
  %1080 = vmatpush.bf16.msra.mxu0 0
  %1081 = vmatpush.bf16.msra.mxu0 0
  %1082 = vmatpush.bf16.msra.mxu0 %v1073
  %1083 = vmatmul.bf16.gmra.mxu0 %v1070
  %v1084 = vpop.f32.mrf.mxu0
  %v1085 = vadd.f32 %v1057, %v1084
  %v1086 = vpop.f32.mrf.mxu0
  %1087 = vdwg.mxu0
  %v1088 = vmul.f32 %v1018, %v144
  %v1089 = vmul.f32 %v1019, %v144
  %v1090 = vpack.c.bf16 %v1088, %v1088
  %v1091 = vpack.c.bf16 %v1089, %v1089
  %1092 = vrot.lane.b32.xlu0 %v1031, 56
  %v1093 = vpop.permute.xlu0 %1092
  %1096 = vrot.lane.b32.xlu0 %v1090, 7
  %v1097 = vpop.permute.xlu0 %1096
  %1098 = vrot.lane.b32.xlu0 %v1091, 7
  %v1099 = vpop.permute.xlu0 %1098
  %v1100 = vsel %vm158, %v1097, %v1099
  %v1102 = vsel %vm432, %v1093, 0
  %v1105 = vsel %vm436, %v1100, 0
  %1107 = vmatpush.bf16.msra.mxu0 0
  %1108 = vmatpush.bf16.msra.mxu0 0
  %1109 = vmatpush.bf16.msra.mxu0 0
  %1110 = vmatpush.bf16.msra.mxu0 0
  %1111 = vmatpush.bf16.msra.mxu0 0
  %1112 = vmatpush.bf16.msra.mxu0 0
  %1113 = vmatpush.bf16.msra.mxu0 0
  %1114 = vmatpush.bf16.msra.mxu0 %v1105
  %1115 = vmatmul.bf16.gmra.mxu0 %v1102
  %v1116 = vpop.f32.mrf.mxu0
  %v1117 = vadd.f32 0.0, %v1116
  %v1118 = vpop.f32.mrf.mxu0
  %1119 = vdwg.mxu0
  %v1120 = vadd.f32 %v1085, %v1117
  %v1121 = vmul.f32 %v1018, %v183
  %v1122 = vmul.f32 %v1019, %v183
  %v1123 = vpack.c.bf16 %v1121, %v1121
  %v1124 = vpack.c.bf16 %v1122, %v1122
  %1125 = vrot.lane.b32.xlu0 %v1031, 48
  %v1126 = vpop.permute.xlu0 %1125
  %1129 = vrot.lane.b32.xlu0 %v1123, 1
  %v1130 = vpop.permute.xlu0 %1129
  %1131 = vrot.lane.b32.xlu0 %v1124, 1
  %v1132 = vpop.permute.xlu0 %1131
  %v1133 = vsel %vm197, %v1130, %v1132
  %v1135 = vsel %vm432, %v1126, 0
  %v1138 = vsel %vm436, %v1133, 0
  %1140 = vmatpush.bf16.msra.mxu0 0
  %1141 = vmatpush.bf16.msra.mxu0 0
  %1142 = vmatpush.bf16.msra.mxu0 0
  %1143 = vmatpush.bf16.msra.mxu0 0
  %1144 = vmatpush.bf16.msra.mxu0 0
  %1145 = vmatpush.bf16.msra.mxu0 0
  %1146 = vmatpush.bf16.msra.mxu0 0
  %1147 = vmatpush.bf16.msra.mxu0 %v1138
  %1148 = vmatmul.bf16.gmra.mxu0 %v1135
  %v1149 = vpop.f32.mrf.mxu0
  %v1150 = vadd.f32 0.0, %v1149
  %v1151 = vpop.f32.mrf.mxu0
  %1152 = vdwg.mxu0
  %v1153 = vadd.f32 %v1120, %v1150
  %v1154 = vpack.c.bf16 %v1019, %v1019
  %1155 = vrot.lane.b32.xlu0 %v1031, 40
  %v1156 = vpop.permute.xlu0 %1155
  %v1158 = vsel %vm432, %v1156, 0
  %v1161 = vsel %vm436, %v1154, 0
  %1163 = vmatpush.bf16.msra.mxu0 0
  %1164 = vmatpush.bf16.msra.mxu0 0
  %1165 = vmatpush.bf16.msra.mxu0 0
  %1166 = vmatpush.bf16.msra.mxu0 0
  %1167 = vmatpush.bf16.msra.mxu0 0
  %1168 = vmatpush.bf16.msra.mxu0 0
  %1169 = vmatpush.bf16.msra.mxu0 0
  %1170 = vmatpush.bf16.msra.mxu0 %v1161
  %1171 = vmatmul.bf16.gmra.mxu0 %v1158
  %v1172 = vpop.f32.mrf.mxu0
  %v1173 = vadd.f32 0.0, %v1172
  %v1174 = vpop.f32.mrf.mxu0
  %1175 = vdwg.mxu0
  %v1176 = vadd.f32 %v1153, %v1173
  %v1177 = vld [vmem:[#allocation2 + $0x8] sm:$0xff]
  %v1178 = vld [vmem:[#allocation2 + $0x10] sm:$0xff]
  %v1179 = vmul.f32 %v1177, %v247
  %v1180 = vmul.f32 %v1178, %v247
  %v1181 = vpack.c.bf16 %v1179, %v1179
  %v1182 = vpack.c.bf16 %v1180, %v1180
  %1183 = vrot.lane.b32.xlu0 %v1031, 32
  %v1184 = vpop.permute.xlu0 %1183
  %1187 = vrot.lane.b32.xlu0 %v1181, 127
  %v1188 = vpop.permute.xlu0 %1187
  %1189 = vrot.lane.b32.xlu0 %v1182, 127
  %v1190 = vpop.permute.xlu0 %1189
  %v1191 = vsel %vm261, %v1188, %v1190
  %v1193 = vsel %vm432, %v1184, 0
  %v1196 = vsel %vm436, %v1191, 0
  %1198 = vmatpush.bf16.msra.mxu0 0
  %1199 = vmatpush.bf16.msra.mxu0 0
  %1200 = vmatpush.bf16.msra.mxu0 0
  %1201 = vmatpush.bf16.msra.mxu0 0
  %1202 = vmatpush.bf16.msra.mxu0 0
  %1203 = vmatpush.bf16.msra.mxu0 0
  %1204 = vmatpush.bf16.msra.mxu0 0
  %1205 = vmatpush.bf16.msra.mxu0 %v1196
  %1206 = vmatmul.bf16.gmra.mxu0 %v1193
  %v1207 = vpop.f32.mrf.mxu0
  %v1208 = vadd.f32 0.0, %v1207
  %v1209 = vpop.f32.mrf.mxu0
  %1210 = vdwg.mxu0
  %v1211 = vadd.f32 %v1176, %v1208
  %v1212 = vmul.f32 %v1177, %v286
  %v1213 = vmul.f32 %v1178, %v286
  %v1214 = vpack.c.bf16 %v1212, %v1212
  %v1215 = vpack.c.bf16 %v1213, %v1213
  %1216 = vrot.lane.b32.xlu0 %v1031, 24
  %v1217 = vpop.permute.xlu0 %1216
  %1220 = vrot.lane.b32.xlu0 %v1214, 121
  %v1221 = vpop.permute.xlu0 %1220
  %1222 = vrot.lane.b32.xlu0 %v1215, 121
  %v1223 = vpop.permute.xlu0 %1222
  %v1224 = vsel %vm300, %v1221, %v1223
  %v1226 = vsel %vm432, %v1217, 0
  %v1229 = vsel %vm436, %v1224, 0
  %1231 = vmatpush.bf16.msra.mxu0 0
  %1232 = vmatpush.bf16.msra.mxu0 0
  %1233 = vmatpush.bf16.msra.mxu0 0
  %1234 = vmatpush.bf16.msra.mxu0 0
  %1235 = vmatpush.bf16.msra.mxu0 0
  %1236 = vmatpush.bf16.msra.mxu0 0
  %1237 = vmatpush.bf16.msra.mxu0 0
  %1238 = vmatpush.bf16.msra.mxu0 %v1229
  %1239 = vmatmul.bf16.gmra.mxu0 %v1226
  %v1240 = vpop.f32.mrf.mxu0
  %v1241 = vadd.f32 0.0, %v1240
  %v1242 = vpop.f32.mrf.mxu0
  %1243 = vdwg.mxu0
  %v1244 = vadd.f32 %v1211, %v1241
  %v1245 = vmul.f32 %v1177, %v325
  %v1246 = vmul.f32 %v1178, %v325
  %v1247 = vpack.c.bf16 %v1245, %v1245
  %v1248 = vpack.c.bf16 %v1246, %v1246
  %1249 = vrot.lane.b32.xlu0 %v1031, 16
  %v1250 = vpop.permute.xlu0 %1249
  %1253 = vrot.lane.b32.xlu0 %v1247, 120
  %v1254 = vpop.permute.xlu0 %1253
  %1255 = vrot.lane.b32.xlu0 %v1248, 120
  %v1256 = vpop.permute.xlu0 %1255
  %v1257 = vsel %vm339, %v1254, %v1256
  %v1259 = vsel %vm432, %v1250, 0
  %v1262 = vsel %vm436, %v1257, 0
  %1264 = vmatpush.bf16.msra.mxu0 0
  %1265 = vmatpush.bf16.msra.mxu0 0
  %1266 = vmatpush.bf16.msra.mxu0 0
  %1267 = vmatpush.bf16.msra.mxu0 0
  %1268 = vmatpush.bf16.msra.mxu0 0
  %1269 = vmatpush.bf16.msra.mxu0 0
  %1270 = vmatpush.bf16.msra.mxu0 0
  %1271 = vmatpush.bf16.msra.mxu0 %v1262
  %1272 = vmatmul.bf16.gmra.mxu0 %v1259
  %v1273 = vpop.f32.mrf.mxu0
  %v1274 = vadd.f32 0.0, %v1273
  %v1275 = vpop.f32.mrf.mxu0
  %1276 = vdwg.mxu0
  %v1277 = vadd.f32 %v1244, %v1274
  %v1278 = vmul.f32 %v1177, %v364
  %v1279 = vmul.f32 %v1178, %v364
  %v1280 = vpack.c.bf16 %v1278, %v1278
  %v1281 = vpack.c.bf16 %v1279, %v1279
  %1282 = vrot.lane.b32.xlu0 %v1031, 8
  %v1283 = vpop.permute.xlu0 %1282
  %1286 = vrot.lane.b32.xlu0 %v1280, 119
  %v1287 = vpop.permute.xlu0 %1286
  %1288 = vrot.lane.b32.xlu0 %v1281, 119
  %v1289 = vpop.permute.xlu0 %1288
  %v1290 = vsel %vm378, %v1287, %v1289
  %v1292 = vsel %vm432, %v1283, 0
  %v1295 = vsel %vm436, %v1290, 0
  %1297 = vmatpush.bf16.msra.mxu0 0
  %1298 = vmatpush.bf16.msra.mxu0 0
  %1299 = vmatpush.bf16.msra.mxu0 0
  %1300 = vmatpush.bf16.msra.mxu0 0
  %1301 = vmatpush.bf16.msra.mxu0 0
  %1302 = vmatpush.bf16.msra.mxu0 0
  %1303 = vmatpush.bf16.msra.mxu0 0
  %1304 = vmatpush.bf16.msra.mxu0 %v1295
  %1305 = vmatmul.bf16.gmra.mxu0 %v1292
  %v1306 = vpop.f32.mrf.mxu0
  %v1307 = vadd.f32 0.0, %v1306
  %v1308 = vpop.f32.mrf.mxu0
  %1309 = vdwg.mxu0
  %v1310 = vadd.f32 %v1277, %v1307
  %v1311 = vld [vmem:[%s3] sm:$0xff]
  %1313 = vset.pattern.permute.xlu0 4
  %1314 = vperm.xlu0 %1313, %v1311
  %v1315 = vpop.permute.xlu0 %1314
  %v1317 = vadd.f32 %v1310, %v1315
  %v1318 = vmax.f32 %v1317, 0.0
  %v1319 = vadd.f32 %v712, %v1318
  %1320 = vst [vmem:[%s4] sm:$0xff] %v1319
  // Predicated region
  $region22: #{encoder_block_forward.1} parent=0 // pred_check
    _
  $region23: #{encoder_block_forward.1} parent=0 // pred_check_branch
    %1322 = sbr.rel (0) target = $region25
  $region24: #{encoder_block_forward.1} parent=0 // pred_region
    _
  $region25: #{encoder_block_forward.1} parent=0 // pred_fallthru
    _
  // Predicated region
  $region26: #{encoder_block_forward.1} parent=0 // pred_check
    _
  $region27: #{encoder_block_forward.1} parent=0 // pred_check_branch
    %1324 = sbr.rel (0) target = $region29
  $region28: #{encoder_block_forward.1} parent=0 // pred_region
    _
  $region29: #{encoder_block_forward.1} parent=0 // pred_fallthru
    _

</llo_original>
